<compile_context>
chip_gen: v7x
topology: tpu7x:2x2x1
jax: 0.10.0
libtpu: 0.0.40
codegen_flags: <defaults>
</compile_context>

<pallas_src>
import math

import jax
import jax.numpy as jnp
import numpy as np
from jax.experimental import pallas as pl
from jax.experimental.pallas import tpu as pltpu

# ---- small, DeepSeek-shaped config ----
B = 2          # batch
S = 8          # seq len (start_pos = 0, end_pos = S)
BS = B * S
DIM = 32       # model dim
INTER = 64     # dense MLP inter dim
H = 2          # n_heads
NOPE = 16      # qk_nope_head_dim
ROPE = 8       # qk_rope_head_dim
QKD = NOPE + ROPE
C = 16         # kv_lora_rank
V = 16         # v_head_dim
EPS = 1e-6
SCALE = QKD ** -0.5   # max_seq_len <= original_seq_len -> no yarn mscale correction

# packed h-projection slab column layout
_PE_OFF = C + H * C              # 48
_PE_W = (H + 1) * ROPE           # 24
_SLAB_W = _PE_OFF + 2 * _PE_W    # 96


# ------------------------------ fused Pallas kernel ------------------------------

def fused_block_kernel(x_ref, ag_ref, kvg_ref, fg_ref,
                       wh_ref, wov_ref, w13_ref, w2_ref,
                       cos_ref, sin_ref, mask_ref,
                       o_ref):
    f32 = jnp.float32
    x = x_ref[...]                                                        # (S, DIM)

    # ---- attn_norm (RMSNorm): rsqrt -> EUP ----
    h = x * jax.lax.rsqrt(jnp.mean(x * x, axis=-1, keepdims=True) + EPS) * ag_ref[...]

    # ---- ONE packed projection of h (single MXU pass, 96 lanes) ----
    # columns: [kv_c | q_np(head0) | q_np(head1) | pe(q0,q1,k) | pe_swapped(q0,q1,k)]
    proj = jnp.dot(h, wh_ref[...], preferred_element_type=f32)            # (S, 96)

    # kv_norm (== kv_cache rows for this prefill)
    kv_c = proj[:, :C]
    kv_c = (kv_c * jax.lax.rsqrt(jnp.mean(kv_c * kv_c, axis=-1, keepdims=True) + EPS)
            * kvg_ref[...])                                               # (S, C)

    # interleaved rotary for all pe columns at once (swap folded into weight columns)
    pe = proj[:, _PE_OFF:_PE_OFF + _PE_W]                                 # (S, 24)
    pe_sw = proj[:, _PE_OFF + _PE_W:]                                     # (S, 24)
    pe_rot = pe * cos_ref[...] + pe_sw * sin_ref[...]                     # (S, 24)
    k_pe_rot = pe_rot[:, H * ROPE:]                                       # (S, ROPE)

    # K-side transposes hoisted out of the head loop
    kv_c_t = kv_c.T                                                       # (C, S)
    k_pe_rot_t = k_pe_rot.T                                               # (ROPE, S)

    mask = mask_ref[...]                                                  # (S, S) causal
    oc_heads = []
    for hd in range(H):   # static unroll
        q_np = proj[:, C + hd * C: C + (hd + 1) * C]                      # (S, C) absorbed
        q_pe = pe_rot[:, hd * ROPE: (hd + 1) * ROPE]                      # (S, ROPE)
        scores = (jnp.dot(q_np, kv_c_t, preferred_element_type=f32)
                  + jnp.dot(q_pe, k_pe_rot_t, preferred_element_type=f32)) * SCALE
        scores = scores + mask                                            # (S, S)

        # softmax over keys; reciprocal on EUP (exact)
        m = jnp.max(scores, axis=-1, keepdims=True)
        e = jnp.exp(scores - m)
        p = e * pl.reciprocal(jnp.sum(e, axis=-1, keepdims=True), approx=False)

        oc_heads.append(jnp.dot(p, kv_c, preferred_element_type=f32))     # (S, C)

    # lane-contiguous head outputs -> ONE composed (value @ wo) projection
    oc = jnp.concatenate(oc_heads, axis=-1)                               # (S, H*C)
    attn = jnp.dot(oc, wov_ref[...], preferred_element_type=f32)          # (S, DIM)

    x1 = x + attn                                                         # residual 1

    # ---- ffn_norm + dense MLP (fused w1/w3) + residual ----
    h2 = x1 * jax.lax.rsqrt(jnp.mean(x1 * x1, axis=-1, keepdims=True) + EPS) * fg_ref[...]
    ab = jnp.dot(h2, w13_ref[...], preferred_element_type=f32)            # (S, 2*INTER)=(8,128)
    a = ab[:, :INTER]
    b = ab[:, INTER:]
    g = a * jax.lax.logistic(a)                                           # silu
    y = jnp.dot(g * b, w2_ref[...], preferred_element_type=f32)           # (S, DIM)
    o_ref[...] = x1 + y                                                   # residual 2


# ------------------------------ wrapper ------------------------------

def block_forward(x, p, cos, sin, mask_causal):
    """x: (B, S, DIM). cos/sin: (S, ROPE//2). mask_causal: (S, S)."""
    swap = np.arange(ROPE) ^ 1                                            # adjacent-pair swap

    # rotary tables, tiled over the (H+1) pe groups [q_pe_h0 | q_pe_h1 | k_pe]
    cos_rep = jnp.repeat(cos, 2, axis=-1)                                 # (S, ROPE)
    sin_alt = jnp.stack([-sin, sin], axis=-1).reshape(S, ROPE)            # (S, ROPE)
    cos_t = jnp.tile(cos_rep, (1, H + 1))                                 # (S, 24)
    sin_t = jnp.tile(sin_alt, (1, H + 1))                                 # (S, 24)

    # ---- host-side weight packing (layout plumbing + weight pre-composition) ----
    wq_r = p['wq'].reshape(H, QKD, DIM)
    wkvb_r = p['wkv_b'].reshape(H, NOPE + V, C)

    # absorbed q_nope projections: (DIM, NOPE) @ (NOPE, C) -> (DIM, C) per head
    w_qnp = [wq_r[hd, :NOPE, :].T @ wkvb_r[hd, :NOPE, :] for hd in range(H)]

    # pe projections (interleaved layout) + pair-swapped copies, as extra slab columns
    wq_pe = [wq_r[hd, NOPE:, :].T for hd in range(H)]                     # (DIM, ROPE) each
    wk_pe = p['wkv_a'][C:].T                                              # (DIM, ROPE)
    pe_cols = jnp.concatenate(wq_pe + [wk_pe], axis=1)                    # (DIM, 24)
    pe_sw_cols = jnp.concatenate([w[:, swap] for w in wq_pe] + [wk_pe[:, swap]], axis=1)

    w_h = jnp.concatenate([p['wkv_a'][:C].T] + w_qnp + [pe_cols, pe_sw_cols], axis=1)
    assert w_h.shape == (DIM, _SLAB_W)

    # composed value+output projection: (C, V) @ (V, DIM) -> (C, DIM) per head, stacked
    w_ov = jnp.concatenate(
        [wkvb_r[hd, NOPE:, :].T @ p['wo'][:, hd * V:(hd + 1) * V].T for hd in range(H)],
        axis=0)                                                           # (H*C, DIM)

    w13 = jnp.concatenate([p['w1'].T, p['w3'].T], axis=1)                 # (DIM, 2*INTER)
    w2_t = p['w2'].T                                                      # (INTER, DIM)

    args = (x.reshape(BS, DIM),
            p['attn_gamma'], p['kv_gamma'], p['ffn_gamma'],
            w_h, w_ov, w13, w2_t,
            cos_t, sin_t, mask_causal)

    def full_spec(a):
        nd = a.ndim
        return pl.BlockSpec(a.shape, lambda b, _nd=nd: (0,) * _nd)

    in_specs = ([pl.BlockSpec((S, DIM), lambda b: (b, 0))]
                + [full_spec(a) for a in args[1:]])

    out = pl.pallas_call(
        fused_block_kernel,
        out_shape=jax.ShapeDtypeStruct((BS, DIM), jnp.float32),
        grid=(B,),
        in_specs=in_specs,
        out_specs=pl.BlockSpec((S, DIM), lambda b: (b, 0)),
        compiler_params=pltpu.CompilerParams(dimension_semantics=("parallel",)),
    )(*args)
    return out.reshape(B, S, DIM)


# ------------------------------ pure-JAX reference ------------------------------

def _rope_ref(x, cos, sin):
    # x: (B, S, Hh, R), cos/sin: (S, R//2) -- torch.view_as_complex semantics
    xr = x.reshape(x.shape[:-1] + (x.shape[-1] // 2, 2))
    x0, x1 = xr[..., 0], xr[..., 1]
    c = cos[None, :, None, :]
    s = sin[None, :, None, :]
    y0 = x0 * c - x1 * s
    y1 = x0 * s + x1 * c
    return jnp.stack([y0, y1], axis=-1).reshape(x.shape)


def _rmsnorm_ref(x, g):
    return x / jnp.sqrt(jnp.mean(x * x, axis=-1, keepdims=True) + EPS) * g.reshape(-1)


def reference(x, p, cos, sin, mask):
    hN = _rmsnorm_ref(x, p['attn_gamma'])
    q = (hN @ p['wq'].T).reshape(B, S, H, QKD)
    q_nope, q_pe = q[..., :NOPE], q[..., NOPE:]
    q_pe = _rope_ref(q_pe, cos, sin)
    kva = hN @ p['wkv_a'].T
    kv, k_pe = kva[..., :C], kva[..., C:]
    k_pe = _rope_ref(k_pe[:, :, None, :], cos, sin)[:, :, 0, :]
    kv_c = _rmsnorm_ref(kv, p['kv_gamma'])
    wkvb = p['wkv_b'].reshape(H, NOPE + V, C)
    q_np = jnp.einsum('bshd,hdc->bshc', q_nope, wkvb[:, :NOPE])
    scores = (jnp.einsum('bshc,btc->bsht', q_np, kv_c)
              + jnp.einsum('bshr,btr->bsht', q_pe, k_pe)) * SCALE
    scores = scores + mask[None, :, None, :]
    pr = jax.nn.softmax(scores, axis=-1)
    out = jnp.einsum('bsht,btc->bshc', pr, kv_c)
    out = jnp.einsum('bshc,hdc->bshd', out, wkvb[:, NOPE:])
    x1 = x + out.reshape(B, S, H * V) @ p['wo'].T
    h2 = _rmsnorm_ref(x1, p['ffn_gamma'])
    y = (jax.nn.silu(h2 @ p['w1'].T) * (h2 @ p['w3'].T)) @ p['w2'].T
    return x1 + y


# ------------------------------ main ------------------------------

def _xavier(key, out_f, in_f):
    std = math.sqrt(2.0 / (in_f + out_f))
    return jax.random.normal(key, (out_f, in_f), jnp.float32) * std


if __name__ == "__main__":
    root = jax.random.PRNGKey(0)
    keys = jax.random.split(root, 9)

    params = {
        'attn_gamma': jnp.ones((1, DIM), jnp.float32),
        'kv_gamma':   jnp.ones((1, C), jnp.float32),
        'ffn_gamma':  jnp.ones((1, DIM), jnp.float32),
        'wq':    _xavier(keys[0], H * QKD, DIM),
        'wkv_a': _xavier(keys[1], C + ROPE, DIM),
        'wkv_b': _xavier(keys[2], H * (NOPE + V), C),
        'wo':    _xavier(keys[3], DIM, H * V),
        'w1':    _xavier(keys[4], INTER, DIM),
        'w2':    _xavier(keys[5], DIM, INTER),
        'w3':    _xavier(keys[6], INTER, DIM),
    }

    # rotary tables (freqs_cis equivalent), theta = 10000
    half = ROPE // 2
    inv_freq = 1.0 / (10000.0 ** (jnp.arange(half, dtype=jnp.float32) * 2.0 / ROPE))
    ang = jnp.outer(jnp.arange(S, dtype=jnp.float32), inv_freq)           # (S, half)
    cos = jnp.cos(ang)
    sin = jnp.sin(ang)

    # per-batch causal mask (shared by kernel and reference)
    rows = np.arange(S)
    mask_causal = jnp.asarray(np.where(rows[None, :] > rows[:, None], -1e30, 0.0),
                              jnp.float32)                                # (S, S)

    x = jax.random.normal(keys[7], (B, S, DIM), jnp.float32)

    out = block_forward(x, params, cos, sin, mask_causal)
    out = jax.block_until_ready(out)

    ref = reference(x, params, cos, sin, mask_causal)
    np.testing.assert_allclose(np.asarray(out), np.asarray(ref), rtol=2e-3, atol=2e-3)

    print("KERNEL_OK")
</pallas_src>

<mosaic_0001>
module attributes {stable_mosaic.version = 11 : i64} {
  func.func @fused_block_kernel(%arg0: i32, %arg1: memref<8x32xf32, #tpu.memory_space<vmem>>, %arg2: memref<1x32xf32, #tpu.memory_space<vmem>>, %arg3: memref<1x16xf32, #tpu.memory_space<vmem>>, %arg4: memref<1x32xf32, #tpu.memory_space<vmem>>, %arg5: memref<32x96xf32, #tpu.memory_space<vmem>>, %arg6: memref<32x32xf32, #tpu.memory_space<vmem>>, %arg7: memref<32x128xf32, #tpu.memory_space<vmem>>, %arg8: memref<64x32xf32, #tpu.memory_space<vmem>>, %arg9: memref<8x24xf32, #tpu.memory_space<vmem>>, %arg10: memref<8x24xf32, #tpu.memory_space<vmem>>, %arg11: memref<8x8xf32, #tpu.memory_space<vmem>>, %arg12: memref<8x32xf32, #tpu.memory_space<vmem>>) attributes {dimension_semantics = [#tpu.dimension_semantics<parallel>], iteration_bounds = array<i64: 2>, scalar_prefetch = 0 : i64, scratch_operands = 0 : i64, tpu.core_type = #tpu.core_type<tc>, window_params = [{transform_indices = @transform_0, window_bounds = array<i64: 8, 32>}, {pipeline_mode = #tpu.pipeline_mode<synchronous>, transform_indices = @transform_1, window_bounds = array<i64: 1, 32>}, {pipeline_mode = #tpu.pipeline_mode<synchronous>, transform_indices = @transform_2, window_bounds = array<i64: 1, 16>}, {pipeline_mode = #tpu.pipeline_mode<synchronous>, transform_indices = @transform_3, window_bounds = array<i64: 1, 32>}, {pipeline_mode = #tpu.pipeline_mode<synchronous>, transform_indices = @transform_4, window_bounds = array<i64: 32, 96>}, {pipeline_mode = #tpu.pipeline_mode<synchronous>, transform_indices = @transform_5, window_bounds = array<i64: 32, 32>}, {pipeline_mode = #tpu.pipeline_mode<synchronous>, transform_indices = @transform_6, window_bounds = array<i64: 32, 128>}, {pipeline_mode = #tpu.pipeline_mode<synchronous>, transform_indices = @transform_7, window_bounds = array<i64: 64, 32>}, {pipeline_mode = #tpu.pipeline_mode<synchronous>, transform_indices = @transform_8, window_bounds = array<i64: 8, 24>}, {pipeline_mode = #tpu.pipeline_mode<synchronous>, transform_indices = @transform_9, window_bounds = array<i64: 8, 24>}, {pipeline_mode = #tpu.pipeline_mode<synchronous>, transform_indices = @transform_10, window_bounds = array<i64: 8, 8>}, {transform_indices = @transform_11, window_bounds = array<i64: 8, 32>}]} {
    %c0 = arith.constant 0 : index
    %c0_0 = arith.constant 0 : index
    %0 = vector.load %arg1[%c0, %c0_0] : memref<8x32xf32, #tpu.memory_space<vmem>>, vector<8x32xf32>
    %1 = arith.mulf %0, %0 : vector<8x32xf32>
    %cst = arith.constant dense<0.000000e+00> : vector<8xf32>
    %2 = vector.multi_reduction <add>, %1, %cst [1] : vector<8x32xf32> to vector<8xf32>
    %3 = vector.shape_cast %2 : vector<8xf32> to vector<8x1xf32>
    %cst_1 = arith.constant 3.200000e+01 : f32
    %4 = vector.broadcast %cst_1 : f32 to vector<8x1xf32>
    %5 = arith.divf %3, %4 : vector<8x1xf32>
    %cst_2 = arith.constant 9.99999997E-7 : f32
    %6 = vector.broadcast %cst_2 : f32 to vector<8x1xf32>
    %7 = arith.addf %5, %6 : vector<8x1xf32>
    %8 = math.rsqrt %7 : vector<8x1xf32>
    %9 = vector.broadcast %8 : vector<8x1xf32> to vector<8x32xf32>
    %10 = arith.mulf %0, %9 : vector<8x32xf32>
    %c0_3 = arith.constant 0 : index
    %c0_4 = arith.constant 0 : index
    %11 = vector.load %arg2[%c0_3, %c0_4] : memref<1x32xf32, #tpu.memory_space<vmem>>, vector<1x32xf32>
    %12 = vector.broadcast %11 : vector<1x32xf32> to vector<8x32xf32>
    %13 = arith.mulf %10, %12 : vector<8x32xf32>
    %c0_5 = arith.constant 0 : index
    %c0_6 = arith.constant 0 : index
    %14 = vector.load %arg5[%c0_5, %c0_6] : memref<32x96xf32, #tpu.memory_space<vmem>>, vector<32x96xf32>
    %cst_7 = arith.constant dense<0.000000e+00> : vector<8x96xf32>
    %15 = tpu.matmul %13, %14, %cst_7 {dimension_numbers = #tpu.dot_dimension_numbers<[1], [0], [0], [1], [0, 0, 1, 1], [], []>} : vector<8x32xf32>, vector<32x96xf32>, vector<8x96xf32> -> vector<8x96xf32>
    %16 = vector.extract_strided_slice %15 {offsets = [0, 0], sizes = [8, 16], strides = [1, 1]} : vector<8x96xf32> to vector<8x16xf32>
    %17 = arith.mulf %16, %16 : vector<8x16xf32>
    %cst_8 = arith.constant dense<0.000000e+00> : vector<8xf32>
    %18 = vector.multi_reduction <add>, %17, %cst_8 [1] : vector<8x16xf32> to vector<8xf32>
    %19 = vector.shape_cast %18 : vector<8xf32> to vector<8x1xf32>
    %cst_9 = arith.constant 1.600000e+01 : f32
    %20 = vector.broadcast %cst_9 : f32 to vector<8x1xf32>
    %21 = arith.divf %19, %20 : vector<8x1xf32>
    %cst_10 = arith.constant 9.99999997E-7 : f32
    %22 = vector.broadcast %cst_10 : f32 to vector<8x1xf32>
    %23 = arith.addf %21, %22 : vector<8x1xf32>
    %24 = math.rsqrt %23 : vector<8x1xf32>
    %25 = vector.broadcast %24 : vector<8x1xf32> to vector<8x16xf32>
    %26 = arith.mulf %16, %25 : vector<8x16xf32>
    %c0_11 = arith.constant 0 : index
    %c0_12 = arith.constant 0 : index
    %27 = vector.load %arg3[%c0_11, %c0_12] : memref<1x16xf32, #tpu.memory_space<vmem>>, vector<1x16xf32>
    %28 = vector.broadcast %27 : vector<1x16xf32> to vector<8x16xf32>
    %29 = arith.mulf %26, %28 : vector<8x16xf32>
    %30 = vector.extract_strided_slice %15 {offsets = [0, 48], sizes = [8, 24], strides = [1, 1]} : vector<8x96xf32> to vector<8x24xf32>
    %31 = vector.extract_strided_slice %15 {offsets = [0, 72], sizes = [8, 24], strides = [1, 1]} : vector<8x96xf32> to vector<8x24xf32>
    %c0_13 = arith.constant 0 : index
    %c0_14 = arith.constant 0 : index
    %32 = vector.load %arg9[%c0_13, %c0_14] : memref<8x24xf32, #tpu.memory_space<vmem>>, vector<8x24xf32>
    %33 = arith.mulf %30, %32 : vector<8x24xf32>
    %c0_15 = arith.constant 0 : index
    %c0_16 = arith.constant 0 : index
    %34 = vector.load %arg10[%c0_15, %c0_16] : memref<8x24xf32, #tpu.memory_space<vmem>>, vector<8x24xf32>
    %35 = arith.mulf %31, %34 : vector<8x24xf32>
    %36 = arith.addf %33, %35 : vector<8x24xf32>
    %37 = vector.extract_strided_slice %36 {offsets = [0, 16], sizes = [8, 8], strides = [1, 1]} : vector<8x24xf32> to vector<8x8xf32>
    %38 = tpu.transpose %29, [1, 0] : vector<8x16xf32> -> vector<16x8xf32>
    %39 = tpu.transpose %37, [1, 0] : vector<8x8xf32> -> vector<8x8xf32>
    %c0_17 = arith.constant 0 : index
    %c0_18 = arith.constant 0 : index
    %40 = vector.load %arg11[%c0_17, %c0_18] : memref<8x8xf32, #tpu.memory_space<vmem>>, vector<8x8xf32>
    %41 = vector.extract_strided_slice %15 {offsets = [0, 16], sizes = [8, 16], strides = [1, 1]} : vector<8x96xf32> to vector<8x16xf32>
    %42 = vector.extract_strided_slice %36 {offsets = [0, 0], sizes = [8, 8], strides = [1, 1]} : vector<8x24xf32> to vector<8x8xf32>
    %cst_19 = arith.constant dense<0.000000e+00> : vector<8x8xf32>
    %43 = tpu.matmul %41, %38, %cst_19 {dimension_numbers = #tpu.dot_dimension_numbers<[1], [0], [0], [1], [0, 0, 1, 1], [], []>} : vector<8x16xf32>, vector<16x8xf32>, vector<8x8xf32> -> vector<8x8xf32>
    %cst_20 = arith.constant dense<0.000000e+00> : vector<8x8xf32>
    %44 = tpu.matmul %42, %39, %cst_20 {dimension_numbers = #tpu.dot_dimension_numbers<[1], [0], [0], [1], [0, 0, 1, 1], [], []>} : vector<8x8xf32>, vector<8x8xf32>, vector<8x8xf32> -> vector<8x8xf32>
    %45 = arith.addf %43, %44 : vector<8x8xf32>
    %cst_21 = arith.constant 0.204124153 : f32
    %46 = vector.broadcast %cst_21 : f32 to vector<8x8xf32>
    %47 = arith.mulf %45, %46 : vector<8x8xf32>
    %48 = arith.addf %47, %40 : vector<8x8xf32>
    %cst_22 = arith.constant dense<0xFF800000> : vector<8xf32>
    %49 = vector.multi_reduction <maximumf>, %48, %cst_22 [1] : vector<8x8xf32> to vector<8xf32>
    %50 = vector.shape_cast %49 : vector<8xf32> to vector<8x1xf32>
    %51 = vector.broadcast %50 : vector<8x1xf32> to vector<8x8xf32>
    %52 = arith.subf %48, %51 : vector<8x8xf32>
    %53 = math.exp %52 : vector<8x8xf32>
    %cst_23 = arith.constant dense<0.000000e+00> : vector<8xf32>
    %54 = vector.multi_reduction <add>, %53, %cst_23 [1] : vector<8x8xf32> to vector<8xf32>
    %55 = vector.shape_cast %54 : vector<8xf32> to vector<8x1xf32>
    %56 = tpu.reciprocal %55 : vector<8x1xf32> -> vector<8x1xf32>
    %57 = vector.broadcast %56 : vector<8x1xf32> to vector<8x8xf32>
    %58 = arith.mulf %53, %57 : vector<8x8xf32>
    %cst_24 = arith.constant dense<0.000000e+00> : vector<8x16xf32>
    %59 = tpu.matmul %58, %29, %cst_24 {dimension_numbers = #tpu.dot_dimension_numbers<[1], [0], [0], [1], [0, 0, 1, 1], [], []>} : vector<8x8xf32>, vector<8x16xf32>, vector<8x16xf32> -> vector<8x16xf32>
    %60 = vector.extract_strided_slice %15 {offsets = [0, 32], sizes = [8, 16], strides = [1, 1]} : vector<8x96xf32> to vector<8x16xf32>
    %61 = vector.extract_strided_slice %36 {offsets = [0, 8], sizes = [8, 8], strides = [1, 1]} : vector<8x24xf32> to vector<8x8xf32>
    %cst_25 = arith.constant dense<0.000000e+00> : vector<8x8xf32>
    %62 = tpu.matmul %60, %38, %cst_25 {dimension_numbers = #tpu.dot_dimension_numbers<[1], [0], [0], [1], [0, 0, 1, 1], [], []>} : vector<8x16xf32>, vector<16x8xf32>, vector<8x8xf32> -> vector<8x8xf32>
    %cst_26 = arith.constant dense<0.000000e+00> : vector<8x8xf32>
    %63 = tpu.matmul %61, %39, %cst_26 {dimension_numbers = #tpu.dot_dimension_numbers<[1], [0], [0], [1], [0, 0, 1, 1], [], []>} : vector<8x8xf32>, vector<8x8xf32>, vector<8x8xf32> -> vector<8x8xf32>
    %64 = arith.addf %62, %63 : vector<8x8xf32>
    %cst_27 = arith.constant 0.204124153 : f32
    %65 = vector.broadcast %cst_27 : f32 to vector<8x8xf32>
    %66 = arith.mulf %64, %65 : vector<8x8xf32>
    %67 = arith.addf %66, %40 : vector<8x8xf32>
    %cst_28 = arith.constant dense<0xFF800000> : vector<8xf32>
    %68 = vector.multi_reduction <maximumf>, %67, %cst_28 [1] : vector<8x8xf32> to vector<8xf32>
    %69 = vector.shape_cast %68 : vector<8xf32> to vector<8x1xf32>
    %70 = vector.broadcast %69 : vector<8x1xf32> to vector<8x8xf32>
    %71 = arith.subf %67, %70 : vector<8x8xf32>
    %72 = math.exp %71 : vector<8x8xf32>
    %cst_29 = arith.constant dense<0.000000e+00> : vector<8xf32>
    %73 = vector.multi_reduction <add>, %72, %cst_29 [1] : vector<8x8xf32> to vector<8xf32>
    %74 = vector.shape_cast %73 : vector<8xf32> to vector<8x1xf32>
    %75 = tpu.reciprocal %74 : vector<8x1xf32> -> vector<8x1xf32>
    %76 = vector.broadcast %75 : vector<8x1xf32> to vector<8x8xf32>
    %77 = arith.mulf %72, %76 : vector<8x8xf32>
    %cst_30 = arith.constant dense<0.000000e+00> : vector<8x16xf32>
    %78 = tpu.matmul %77, %29, %cst_30 {dimension_numbers = #tpu.dot_dimension_numbers<[1], [0], [0], [1], [0, 0, 1, 1], [], []>} : vector<8x8xf32>, vector<8x16xf32>, vector<8x16xf32> -> vector<8x16xf32>
    %79 = tpu.concatenate %59, %78 in 1 : vector<8x16xf32>, vector<8x16xf32> -> vector<8x32xf32>
    %c0_31 = arith.constant 0 : index
    %c0_32 = arith.constant 0 : index
    %80 = vector.load %arg6[%c0_31, %c0_32] : memref<32x32xf32, #tpu.memory_space<vmem>>, vector<32x32xf32>
    %cst_33 = arith.constant dense<0.000000e+00> : vector<8x32xf32>
    %81 = tpu.matmul %79, %80, %cst_33 {dimension_numbers = #tpu.dot_dimension_numbers<[1], [0], [0], [1], [0, 0, 1, 1], [], []>} : vector<8x32xf32>, vector<32x32xf32>, vector<8x32xf32> -> vector<8x32xf32>
    %82 = arith.addf %0, %81 : vector<8x32xf32>
    %83 = arith.mulf %82, %82 : vector<8x32xf32>
    %cst_34 = arith.constant dense<0.000000e+00> : vector<8xf32>
    %84 = vector.multi_reduction <add>, %83, %cst_34 [1] : vector<8x32xf32> to vector<8xf32>
    %85 = vector.shape_cast %84 : vector<8xf32> to vector<8x1xf32>
    %cst_35 = arith.constant 3.200000e+01 : f32
    %86 = vector.broadcast %cst_35 : f32 to vector<8x1xf32>
    %87 = arith.divf %85, %86 : vector<8x1xf32>
    %cst_36 = arith.constant 9.99999997E-7 : f32
    %88 = vector.broadcast %cst_36 : f32 to vector<8x1xf32>
    %89 = arith.addf %87, %88 : vector<8x1xf32>
    %90 = math.rsqrt %89 : vector<8x1xf32>
    %91 = vector.broadcast %90 : vector<8x1xf32> to vector<8x32xf32>
    %92 = arith.mulf %82, %91 : vector<8x32xf32>
    %c0_37 = arith.constant 0 : index
    %c0_38 = arith.constant 0 : index
    %93 = vector.load %arg4[%c0_37, %c0_38] : memref<1x32xf32, #tpu.memory_space<vmem>>, vector<1x32xf32>
    %94 = vector.broadcast %93 : vector<1x32xf32> to vector<8x32xf32>
    %95 = arith.mulf %92, %94 : vector<8x32xf32>
    %c0_39 = arith.constant 0 : index
    %c0_40 = arith.constant 0 : index
    %96 = vector.load %arg7[%c0_39, %c0_40] : memref<32x128xf32, #tpu.memory_space<vmem>>, vector<32x128xf32>
    %cst_41 = arith.constant dense<0.000000e+00> : vector<8x128xf32>
    %97 = tpu.matmul %95, %96, %cst_41 {dimension_numbers = #tpu.dot_dimension_numbers<[1], [0], [0], [1], [0, 0, 1, 1], [], []>} : vector<8x32xf32>, vector<32x128xf32>, vector<8x128xf32> -> vector<8x128xf32>
    %98 = vector.extract_strided_slice %97 {offsets = [0, 0], sizes = [8, 64], strides = [1, 1]} : vector<8x128xf32> to vector<8x64xf32>
    %99 = vector.extract_strided_slice %97 {offsets = [0, 64], sizes = [8, 64], strides = [1, 1]} : vector<8x128xf32> to vector<8x64xf32>
    %100 = arith.negf %98 : vector<8x64xf32>
    %101 = math.exp %100 : vector<8x64xf32>
    %cst_42 = arith.constant 1.000000e+00 : f32
    %102 = vector.broadcast %cst_42 : f32 to vector<8x64xf32>
    %103 = arith.addf %102, %101 : vector<8x64xf32>
    %104 = arith.divf %102, %103 : vector<8x64xf32>
    %105 = arith.mulf %98, %104 : vector<8x64xf32>
    %106 = arith.mulf %105, %99 : vector<8x64xf32>
    %c0_43 = arith.constant 0 : index
    %c0_44 = arith.constant 0 : index
    %107 = vector.load %arg8[%c0_43, %c0_44] : memref<64x32xf32, #tpu.memory_space<vmem>>, vector<64x32xf32>
    %cst_45 = arith.constant dense<0.000000e+00> : vector<8x32xf32>
    %108 = tpu.matmul %106, %107, %cst_45 {dimension_numbers = #tpu.dot_dimension_numbers<[1], [0], [0], [1], [0, 0, 1, 1], [], []>} : vector<8x64xf32>, vector<64x32xf32>, vector<8x32xf32> -> vector<8x32xf32>
    %109 = arith.addf %82, %108 : vector<8x32xf32>
    %c0_46 = arith.constant 0 : index
    %c0_47 = arith.constant 0 : index
    %110 = vector.load %arg12[%c0_46, %c0_47] : memref<8x32xf32, #tpu.memory_space<vmem>>, vector<8x32xf32>
    tpu.vector_store %arg12[%c0_46, %c0_47], %109 {strides = array<i32>} : memref<8x32xf32, #tpu.memory_space<vmem>>, vector<8x32xf32>,
    return
  }
  func.func @transform_0(%arg0: i32) -> (i32, i32) {
    %c0_i32 = arith.constant 0 : i32
    %c0_i32_0 = arith.constant 0 : i32
    return %arg0, %c0_i32 : i32, i32
  }
  func.func @transform_1(%arg0: i32) -> (i32, i32) {
    %c0_i32 = arith.constant 0 : i32
    %c0_i32_0 = arith.constant 0 : i32
    %c0_i32_1 = arith.constant 0 : i32
    return %c0_i32, %c0_i32_0 : i32, i32
  }
  func.func @transform_2(%arg0: i32) -> (i32, i32) {
    %c0_i32 = arith.constant 0 : i32
    %c0_i32_0 = arith.constant 0 : i32
    %c0_i32_1 = arith.constant 0 : i32
    return %c0_i32, %c0_i32_0 : i32, i32
  }
  func.func @transform_3(%arg0: i32) -> (i32, i32) {
    %c0_i32 = arith.constant 0 : i32
    %c0_i32_0 = arith.constant 0 : i32
    %c0_i32_1 = arith.constant 0 : i32
    return %c0_i32, %c0_i32_0 : i32, i32
  }
  func.func @transform_4(%arg0: i32) -> (i32, i32) {
    %c0_i32 = arith.constant 0 : i32
    %c0_i32_0 = arith.constant 0 : i32
    %c0_i32_1 = arith.constant 0 : i32
    return %c0_i32, %c0_i32_0 : i32, i32
  }
  func.func @transform_5(%arg0: i32) -> (i32, i32) {
    %c0_i32 = arith.constant 0 : i32
    %c0_i32_0 = arith.constant 0 : i32
    %c0_i32_1 = arith.constant 0 : i32
    return %c0_i32, %c0_i32_0 : i32, i32
  }
  func.func @transform_6(%arg0: i32) -> (i32, i32) {
    %c0_i32 = arith.constant 0 : i32
    %c0_i32_0 = arith.constant 0 : i32
    %c0_i32_1 = arith.constant 0 : i32
    return %c0_i32, %c0_i32_0 : i32, i32
  }
  func.func @transform_7(%arg0: i32) -> (i32, i32) {
    %c0_i32 = arith.constant 0 : i32
    %c0_i32_0 = arith.constant 0 : i32
    %c0_i32_1 = arith.constant 0 : i32
    return %c0_i32, %c0_i32_0 : i32, i32
  }
  func.func @transform_8(%arg0: i32) -> (i32, i32) {
    %c0_i32 = arith.constant 0 : i32
    %c0_i32_0 = arith.constant 0 : i32
    %c0_i32_1 = arith.constant 0 : i32
    return %c0_i32, %c0_i32_0 : i32, i32
  }
  func.func @transform_9(%arg0: i32) -> (i32, i32) {
    %c0_i32 = arith.constant 0 : i32
    %c0_i32_0 = arith.constant 0 : i32
    %c0_i32_1 = arith.constant 0 : i32
    return %c0_i32, %c0_i32_0 : i32, i32
  }
  func.func @transform_10(%arg0: i32) -> (i32, i32) {
    %c0_i32 = arith.constant 0 : i32
    %c0_i32_0 = arith.constant 0 : i32
    %c0_i32_1 = arith.constant 0 : i32
    return %c0_i32, %c0_i32_0 : i32, i32
  }
  func.func @transform_11(%arg0: i32) -> (i32, i32) {
    %c0_i32 = arith.constant 0 : i32
    %c0_i32_0 = arith.constant 0 : i32
    return %arg0, %c0_i32 : i32, i32
  }
}

</mosaic_0001>

<llo_original>
// kernel: tpu_custom_call.1
$region0: #{tpu_custom_call.1}
  #allocation0 [shape = 'u32[]', space=smem, size = 0x4, offset = 0x4, fixed_abs, tag = 'smem constant byte address 0x4 - core index']
  #allocation1 [shape = 'u32[144,128]{1,0:T(1,128)}', space=vmem, size = 0x12000, scoped, tag = 'internal scratch']
  %s0 = inlined_call_operand.hbm [shape: f32[16,32], index: 0, kind: input, shape index: {}]
  %s1 = inlined_call_operand.vmem [shape: f32[1,32], index: 1, kind: input, shape index: {}]
  %s2 = inlined_call_operand.vmem [shape: f32[1,16], index: 2, kind: input, shape index: {}]
  %s3 = inlined_call_operand.hbm [shape: f32[1,32], index: 3, kind: input, shape index: {}]
  %s4 = inlined_call_operand.vmem [shape: f32[32,96], index: 4, kind: input, shape index: {}]
  %s5 = inlined_call_operand.vmem [shape: f32[32,32], index: 5, kind: input, shape index: {}]
  %s6 = inlined_call_operand.vmem [shape: f32[32,128], index: 6, kind: input, shape index: {}]
  %s7 = inlined_call_operand.vmem [shape: f32[64,32], index: 7, kind: input, shape index: {}]
  %s8 = inlined_call_operand.vmem [shape: f32[8,24], index: 8, kind: input, shape index: {}]
  %s9 = inlined_call_operand.vmem [shape: f32[8,24], index: 9, kind: input, shape index: {}]
  %s10 = inlined_call_operand.vmem [shape: f32[8,8], index: 10, kind: input, shape index: {}]
  %s11 = inlined_call_operand.hbm [shape: f32[16,32], index: 11, kind: output, shape index: {}]
  %s12 = sld [smem:[#allocation0]]
  $region85: #{tpu_custom_call.1} parent=0
    _
  %s14 = ssub.s32 1, %s12
  %s15 = scalar_select 0, %s14, %s12
  $region1: #{tpu_custom_call.1} parent=0
    #allocation2 [shape = 'u8[8192]{0}', space=vmem, size = 0x2000, scoped, tag = 'input window, operand 0']
    #allocation3 [shape = 's32[2]{0}', space=sflag, size = 0x8, scoped, tag = 'scoped memory for tpu_custom_call.1']
    #allocation4 [shape = 's32[2]{0}', space=sflag, size = 0x8, scoped, tag = 'scoped memory for tpu_custom_call.1']
    #allocation5 [shape = 'u8[512]{0}', space=vmem, size = 0x400, scoped, tag = 'input window, operand 3, single buffered']
    #allocation6 [shape = 's32[1]{0}', space=sflag, size = 0x4, scoped, tag = 'scoped memory for tpu_custom_call.1']
    #allocation7 [shape = 'u8[8192]{0}', space=vmem, size = 0x2000, scoped, tag = 'output window, operand 0']
    %16 = vsyncpa [#allocation3], 0
    %s17 = scalar_lea.sflag [#allocation3], 1
    %18 = vsyncpa %s17, 0
    %19 = vsyncpa [#allocation6], 0
    %20 = vsyncpa [#allocation4], 0
    %s21 = scalar_lea.sflag [#allocation4], 1
    %22 = vsyncpa %s21, 0
    loop: start=0, step=1, limit=4
    $region2: #{tpu_custom_call.1} parent=1 // loop_pre_header
      _
    $region3: #{tpu_custom_call.1} parent=1 // loop_header
      %s24 = sphi 0, %s28
      %p25 = scmp.ge.s32.totalorder %s24, 4
      %s34 = sphi 0, %s36
      %s37 = sphi 0, %s34
      %s38 = sphi 0, %s37
      %s54 = sphi 0, %s38
      %s58 = sphi 0, %s58
      %s60 = sphi 0, %s58
      %s61 = sphi 0, %s60
      %s75 = sphi 0, %s61
      %s79 = sphi 0, %s79
      %s81 = sphi 0, %s79
      %s82 = sphi 0, %s81
      %s96 = sphi 0, %s82
      %s100 = sphi 0, %s100
      %s102 = sphi 0, %s100
      %s103 = sphi 0, %s102
      %s117 = sphi 0, %s103
      %s121 = sphi 0, %s121
      %s123 = sphi 0, %s121
      %s124 = sphi 0, %s123
      %s138 = sphi 0, %s124
      %s142 = sphi 0, %s142
      %s144 = sphi 0, %s142
      %s145 = sphi 0, %s144
      %s159 = sphi 0, %s145
      %s163 = sphi 0, %s163
      %s165 = sphi 0, %s163
      %s166 = sphi 0, %s165
      %s180 = sphi 0, %s166
      %s184 = sphi 0, %s184
      %s186 = sphi 0, %s184
      %s187 = sphi 0, %s186
      %s201 = sphi 0, %s187
      %s205 = sphi 0, %s205
      %s207 = sphi 0, %s205
      %s208 = sphi 0, %s207
      %s222 = sphi 0, %s208
      %s226 = sphi 0, %s226
      %s228 = sphi 0, %s226
      %s229 = sphi 0, %s228
      %s243 = sphi 0, %s229
      %s247 = sphi 0, %s247
      %s249 = sphi 0, %s247
      %s250 = sphi 0, %s249
      %s264 = sphi 0, %s250
      %s270 = sphi 0, %s272
      %s273 = sphi 0, %s270
      %s274 = sphi 0, %s273
      %s290 = sphi 0, %s274
    $region4: #{tpu_custom_call.1} parent=1 // loop_header_branch
      %27 = sbr.rel (%p25) target = $region8
    $region5: #{tpu_custom_call.1} parent=1 // loop_body
      %s29 = ssub.s32 %s24, 1
      %s30 = ssub.s32 %s24, 2
      %s31 = sadd.s32 %s24, 1
      %s32 = ssub.s32 %s24, %s31
      %p33 = scmp.eq.s32.totalorder %s32, 0
      %s35 = sadd.s32 %s34, 1
      %s36 = scalar_select %p33, %s34, %s35
      %p39 = pneg %p33
      %p40 = scmp.eq.s32.totalorder %s24, 1
      %p41 = por %p39, %p40
      %p42 = scmp.ne.s32.totalorder %s34, %s37
      %p43 = scmp.eq.s32.totalorder %s24, 0
      %p44 = por %p42, %p43
      %p45 = scmp.ne.s32.totalorder %s34, %s37
      %p46 = scmp.eq.s32.totalorder %s29, 1
      %p47 = por %p45, %p46
      %p48 = scmp.ne.s32.totalorder %s37, %s38
      %p49 = scmp.eq.s32.totalorder %s29, 0
      %p50 = por %p48, %p49
      %p51 = scmp.ne.s32.totalorder %s37, %s38
      %p52 = scmp.eq.s32.totalorder %s30, 1
      %p53 = por %p51, %p52
      %p55 = scmp.ne.s32.totalorder %s38, %s54
      %p56 = scmp.eq.s32.totalorder %s30, 0
      %p57 = por %p55, %p56
      %s59 = sadd.s32 %s58, 1
      %p62 = scmp.eq.s32.totalorder %s24, 1
      %p63 = scmp.ne.s32.totalorder %s58, %s60
      %p64 = scmp.eq.s32.totalorder %s24, 0
      %p65 = por %p63, %p64
      %p66 = scmp.ne.s32.totalorder %s58, %s60
      %p67 = scmp.eq.s32.totalorder %s29, 1
      %p68 = por %p66, %p67
      %p69 = scmp.ne.s32.totalorder %s60, %s61
      %p70 = scmp.eq.s32.totalorder %s29, 0
      %p71 = por %p69, %p70
      %p72 = scmp.ne.s32.totalorder %s60, %s61
      %p73 = scmp.eq.s32.totalorder %s30, 1
      %p74 = por %p72, %p73
      %p76 = scmp.ne.s32.totalorder %s61, %s75
      %p77 = scmp.eq.s32.totalorder %s30, 0
      %p78 = por %p76, %p77
      %s80 = sadd.s32 %s79, 1
      %p83 = scmp.eq.s32.totalorder %s24, 1
      %p84 = scmp.ne.s32.totalorder %s79, %s81
      %p85 = scmp.eq.s32.totalorder %s24, 0
      %p86 = por %p84, %p85
      %p87 = scmp.ne.s32.totalorder %s79, %s81
      %p88 = scmp.eq.s32.totalorder %s29, 1
      %p89 = por %p87, %p88
      %p90 = scmp.ne.s32.totalorder %s81, %s82
      %p91 = scmp.eq.s32.totalorder %s29, 0
      %p92 = por %p90, %p91
      %p93 = scmp.ne.s32.totalorder %s81, %s82
      %p94 = scmp.eq.s32.totalorder %s30, 1
      %p95 = por %p93, %p94
      %p97 = scmp.ne.s32.totalorder %s82, %s96
      %p98 = scmp.eq.s32.totalorder %s30, 0
      %p99 = por %p97, %p98
      %s101 = sadd.s32 %s100, 1
      %p104 = scmp.eq.s32.totalorder %s24, 1
      %p105 = scmp.ne.s32.totalorder %s100, %s102
      %p106 = scmp.eq.s32.totalorder %s24, 0
      %p107 = por %p105, %p106
      %p108 = scmp.ne.s32.totalorder %s100, %s102
      %p109 = scmp.eq.s32.totalorder %s29, 1
      %p110 = por %p108, %p109
      %p111 = scmp.ne.s32.totalorder %s102, %s103
      %p112 = scmp.eq.s32.totalorder %s29, 0
      %p113 = por %p111, %p112
      %p114 = scmp.ne.s32.totalorder %s102, %s103
      %p115 = scmp.eq.s32.totalorder %s30, 1
      %p116 = por %p114, %p115
      %p118 = scmp.ne.s32.totalorder %s103, %s117
      %p119 = scmp.eq.s32.totalorder %s30, 0
      %p120 = por %p118, %p119
      %s122 = sadd.s32 %s121, 1
      %p125 = scmp.eq.s32.totalorder %s24, 1
      %p126 = scmp.ne.s32.totalorder %s121, %s123
      %p127 = scmp.eq.s32.totalorder %s24, 0
      %p128 = por %p126, %p127
      %p129 = scmp.ne.s32.totalorder %s121, %s123
      %p130 = scmp.eq.s32.totalorder %s29, 1
      %p131 = por %p129, %p130
      %p132 = scmp.ne.s32.totalorder %s123, %s124
      %p133 = scmp.eq.s32.totalorder %s29, 0
      %p134 = por %p132, %p133
      %p135 = scmp.ne.s32.totalorder %s123, %s124
      %p136 = scmp.eq.s32.totalorder %s30, 1
      %p137 = por %p135, %p136
      %p139 = scmp.ne.s32.totalorder %s124, %s138
      %p140 = scmp.eq.s32.totalorder %s30, 0
      %p141 = por %p139, %p140
      %s143 = sadd.s32 %s142, 1
      %p146 = scmp.eq.s32.totalorder %s24, 1
      %p147 = scmp.ne.s32.totalorder %s142, %s144
      %p148 = scmp.eq.s32.totalorder %s24, 0
      %p149 = por %p147, %p148
      %p150 = scmp.ne.s32.totalorder %s142, %s144
      %p151 = scmp.eq.s32.totalorder %s29, 1
      %p152 = por %p150, %p151
      %p153 = scmp.ne.s32.totalorder %s144, %s145
      %p154 = scmp.eq.s32.totalorder %s29, 0
      %p155 = por %p153, %p154
      %p156 = scmp.ne.s32.totalorder %s144, %s145
      %p157 = scmp.eq.s32.totalorder %s30, 1
      %p158 = por %p156, %p157
      %p160 = scmp.ne.s32.totalorder %s145, %s159
      %p161 = scmp.eq.s32.totalorder %s30, 0
      %p162 = por %p160, %p161
      %s164 = sadd.s32 %s163, 1
      %p167 = scmp.eq.s32.totalorder %s24, 1
      %p168 = scmp.ne.s32.totalorder %s163, %s165
      %p169 = scmp.eq.s32.totalorder %s24, 0
      %p170 = por %p168, %p169
      %p171 = scmp.ne.s32.totalorder %s163, %s165
      %p172 = scmp.eq.s32.totalorder %s29, 1
      %p173 = por %p171, %p172
      %p174 = scmp.ne.s32.totalorder %s165, %s166
      %p175 = scmp.eq.s32.totalorder %s29, 0
      %p176 = por %p174, %p175
      %p177 = scmp.ne.s32.totalorder %s165, %s166
      %p178 = scmp.eq.s32.totalorder %s30, 1
      %p179 = por %p177, %p178
      %p181 = scmp.ne.s32.totalorder %s166, %s180
      %p182 = scmp.eq.s32.totalorder %s30, 0
      %p183 = por %p181, %p182
      %s185 = sadd.s32 %s184, 1
      %p188 = scmp.eq.s32.totalorder %s24, 1
      %p189 = scmp.ne.s32.totalorder %s184, %s186
      %p190 = scmp.eq.s32.totalorder %s24, 0
      %p191 = por %p189, %p190
      %p192 = scmp.ne.s32.totalorder %s184, %s186
      %p193 = scmp.eq.s32.totalorder %s29, 1
      %p194 = por %p192, %p193
      %p195 = scmp.ne.s32.totalorder %s186, %s187
      %p196 = scmp.eq.s32.totalorder %s29, 0
      %p197 = por %p195, %p196
      %p198 = scmp.ne.s32.totalorder %s186, %s187
      %p199 = scmp.eq.s32.totalorder %s30, 1
      %p200 = por %p198, %p199
      %p202 = scmp.ne.s32.totalorder %s187, %s201
      %p203 = scmp.eq.s32.totalorder %s30, 0
      %p204 = por %p202, %p203
      %s206 = sadd.s32 %s205, 1
      %p209 = scmp.eq.s32.totalorder %s24, 1
      %p210 = scmp.ne.s32.totalorder %s205, %s207
      %p211 = scmp.eq.s32.totalorder %s24, 0
      %p212 = por %p210, %p211
      %p213 = scmp.ne.s32.totalorder %s205, %s207
      %p214 = scmp.eq.s32.totalorder %s29, 1
      %p215 = por %p213, %p214
      %p216 = scmp.ne.s32.totalorder %s207, %s208
      %p217 = scmp.eq.s32.totalorder %s29, 0
      %p218 = por %p216, %p217
      %p219 = scmp.ne.s32.totalorder %s207, %s208
      %p220 = scmp.eq.s32.totalorder %s30, 1
      %p221 = por %p219, %p220
      %p223 = scmp.ne.s32.totalorder %s208, %s222
      %p224 = scmp.eq.s32.totalorder %s30, 0
      %p225 = por %p223, %p224
      %s227 = sadd.s32 %s226, 1
      %p230 = scmp.eq.s32.totalorder %s24, 1
      %p231 = scmp.ne.s32.totalorder %s226, %s228
      %p232 = scmp.eq.s32.totalorder %s24, 0
      %p233 = por %p231, %p232
      %p234 = scmp.ne.s32.totalorder %s226, %s228
      %p235 = scmp.eq.s32.totalorder %s29, 1
      %p236 = por %p234, %p235
      %p237 = scmp.ne.s32.totalorder %s228, %s229
      %p238 = scmp.eq.s32.totalorder %s29, 0
      %p239 = por %p237, %p238
      %p240 = scmp.ne.s32.totalorder %s228, %s229
      %p241 = scmp.eq.s32.totalorder %s30, 1
      %p242 = por %p240, %p241
      %p244 = scmp.ne.s32.totalorder %s229, %s243
      %p245 = scmp.eq.s32.totalorder %s30, 0
      %p246 = por %p244, %p245
      %s248 = sadd.s32 %s247, 1
      %p251 = scmp.eq.s32.totalorder %s24, 1
      %p252 = scmp.ne.s32.totalorder %s247, %s249
      %p253 = scmp.eq.s32.totalorder %s24, 0
      %p254 = por %p252, %p253
      %p255 = scmp.ne.s32.totalorder %s247, %s249
      %p256 = scmp.eq.s32.totalorder %s29, 1
      %p257 = por %p255, %p256
      %p258 = scmp.ne.s32.totalorder %s249, %s250
      %p259 = scmp.eq.s32.totalorder %s29, 0
      %p260 = por %p258, %p259
      %p261 = scmp.ne.s32.totalorder %s249, %s250
      %p262 = scmp.eq.s32.totalorder %s30, 1
      %p263 = por %p261, %p262
      %p265 = scmp.ne.s32.totalorder %s250, %s264
      %p266 = scmp.eq.s32.totalorder %s30, 0
      %p267 = por %p265, %p266
      %s268 = ssub.s32 %s24, %s31
      %p269 = scmp.eq.s32.totalorder %s268, 0
      %s271 = sadd.s32 %s270, 1
      %s272 = scalar_select %p269, %s270, %s271
      %p275 = pneg %p269
      %p276 = scmp.eq.s32.totalorder %s24, 1
      %p277 = por %p275, %p276
      %p278 = scmp.ne.s32.totalorder %s270, %s273
      %p279 = scmp.eq.s32.totalorder %s24, 0
      %p280 = por %p278, %p279
      %p281 = scmp.ne.s32.totalorder %s270, %s273
      %p282 = scmp.eq.s32.totalorder %s29, 1
      %p283 = por %p281, %p282
      %p284 = scmp.ne.s32.totalorder %s273, %s274
      %p285 = scmp.eq.s32.totalorder %s29, 0
      %p286 = por %p284, %p285
      %p287 = scmp.ne.s32.totalorder %s273, %s274
      %p288 = scmp.eq.s32.totalorder %s30, 1
      %p289 = por %p287, %p288
      %p291 = scmp.ne.s32.totalorder %s274, %s290
      %p292 = scmp.eq.s32.totalorder %s30, 0
      %p293 = por %p291, %p292
      %p294 = scmp.le.s32.totalorder 1, %s24
      %p295 = scmp.lt.s32.totalorder %s24, 3
      %p296 = pnand %p294, %p295
      %p297 = pneg %p296
      // Predicated region
      $region9: #{tpu_custom_call.1} parent=5 // pred_check
        _
      $region10: #{tpu_custom_call.1} parent=5 // pred_check_branch
        %299 = sbr.rel (%p296) target = $region12
      $region11: #{tpu_custom_call.1} parent=5 // pred_region
        %s300 = ssub.s32 %s24, 1
        // Predicated region
        $region13: #{tpu_custom_call.1} parent=11 // pred_check
          %p301 = pneg %p71
        $region14: #{tpu_custom_call.1} parent=11 // pred_check_branch
          %303 = sbr.rel (%p301) target = $region16
        $region15: #{tpu_custom_call.1} parent=11 // pred_region
          _
        $region16: #{tpu_custom_call.1} parent=11 // pred_fallthru
          _
        // Predicated region
        $region17: #{tpu_custom_call.1} parent=11 // pred_check
          %p304 = pneg %p92
        $region18: #{tpu_custom_call.1} parent=11 // pred_check_branch
          %306 = sbr.rel (%p304) target = $region20
        $region19: #{tpu_custom_call.1} parent=11 // pred_region
          _
        $region20: #{tpu_custom_call.1} parent=11 // pred_fallthru
          _
        // Predicated region
        $region21: #{tpu_custom_call.1} parent=11 // pred_check
          %p307 = pneg %p113
        $region22: #{tpu_custom_call.1} parent=11 // pred_check_branch
          %309 = sbr.rel (%p307) target = $region24
        $region23: #{tpu_custom_call.1} parent=11 // pred_region
          %s311 = ssub.s32 16, 16
          %312 = vsyncadd [#allocation6], %s311
          %s314 = sshll.u32 [#allocation5], 4
          %s315 = int_to_ptr.vmem [resolvable:$true] %s314
          %317 = dma.hbm_to_vmem [thread:$0]  %s3, 16, %s315, [#allocation6]
        $region24: #{tpu_custom_call.1} parent=11 // pred_fallthru
          _
        // Predicated region
        $region25: #{tpu_custom_call.1} parent=11 // pred_check
          %p318 = pneg %p134
        $region26: #{tpu_custom_call.1} parent=11 // pred_check_branch
          %320 = sbr.rel (%p318) target = $region28
        $region27: #{tpu_custom_call.1} parent=11 // pred_region
          _
        $region28: #{tpu_custom_call.1} parent=11 // pred_fallthru
          _
        // Predicated region
        $region29: #{tpu_custom_call.1} parent=11 // pred_check
          %p321 = pneg %p155
        $region30: #{tpu_custom_call.1} parent=11 // pred_check_branch
          %323 = sbr.rel (%p321) target = $region32
        $region31: #{tpu_custom_call.1} parent=11 // pred_region
          _
        $region32: #{tpu_custom_call.1} parent=11 // pred_fallthru
          _
        // Predicated region
        $region33: #{tpu_custom_call.1} parent=11 // pred_check
          %p324 = pneg %p176
        $region34: #{tpu_custom_call.1} parent=11 // pred_check_branch
          %326 = sbr.rel (%p324) target = $region36
        $region35: #{tpu_custom_call.1} parent=11 // pred_region
          _
        $region36: #{tpu_custom_call.1} parent=11 // pred_fallthru
          _
        // Predicated region
        $region37: #{tpu_custom_call.1} parent=11 // pred_check
          %p327 = pneg %p197
        $region38: #{tpu_custom_call.1} parent=11 // pred_check_branch
          %329 = sbr.rel (%p327) target = $region40
        $region39: #{tpu_custom_call.1} parent=11 // pred_region
          _
        $region40: #{tpu_custom_call.1} parent=11 // pred_fallthru
          _
        // Predicated region
        $region41: #{tpu_custom_call.1} parent=11 // pred_check
          %p330 = pneg %p218
        $region42: #{tpu_custom_call.1} parent=11 // pred_check_branch
          %332 = sbr.rel (%p330) target = $region44
        $region43: #{tpu_custom_call.1} parent=11 // pred_region
          _
        $region44: #{tpu_custom_call.1} parent=11 // pred_fallthru
          _
        // Predicated region
        $region45: #{tpu_custom_call.1} parent=11 // pred_check
          %p333 = pneg %p239
        $region46: #{tpu_custom_call.1} parent=11 // pred_check_branch
          %335 = sbr.rel (%p333) target = $region48
        $region47: #{tpu_custom_call.1} parent=11 // pred_region
          _
        $region48: #{tpu_custom_call.1} parent=11 // pred_fallthru
          _
        // Predicated region
        $region49: #{tpu_custom_call.1} parent=11 // pred_check
          %p336 = pneg %p260
        $region50: #{tpu_custom_call.1} parent=11 // pred_check_branch
          %338 = sbr.rel (%p336) target = $region52
        $region51: #{tpu_custom_call.1} parent=11 // pred_region
          _
        $region52: #{tpu_custom_call.1} parent=11 // pred_fallthru
          _
      $region12: #{tpu_custom_call.1} parent=5 // pred_fallthru
        _
      %p339 = scmp.lt.s32.totalorder %s24, 2
      // Predicated region
      $region53: #{tpu_custom_call.1} parent=5 // pred_check
        %p340 = pneg %p339
      $region54: #{tpu_custom_call.1} parent=5 // pred_check_branch
        %342 = sbr.rel (%p340) target = $region56
      $region55: #{tpu_custom_call.1} parent=5 // pred_region
        // Predicated region
        $region57: #{tpu_custom_call.1} parent=55 // pred_check
          %p343 = pneg %p44
        $region58: #{tpu_custom_call.1} parent=55 // pred_check_branch
          %345 = sbr.rel (%p343) target = $region60
        $region59: #{tpu_custom_call.1} parent=55 // pred_region
          %s346 = sand.u32 %s34, 1
          %s347 = scalar_lea.sflag [#allocation3], %s346
          %s348 = sand.u32 %s34, 1
          %s349 = smul.addr %s348, 8
          %s350 = scalar_lea.vmem [#allocation2], %s349
          %s352 = ssub.s32 128, 128
          %353 = vsyncadd %s347, %s352
          %s354 = smul.addr %s24, 128
          %s355 = scalar_lea.hbm %s0, %s354
          %s357 = sshll.u32 %s350, 4
          %s358 = int_to_ptr.vmem [resolvable:$true] %s357
          %360 = dma.hbm_to_vmem [thread:$0]  %s355, 128, %s358, %s347
        $region60: #{tpu_custom_call.1} parent=55 // pred_fallthru
          _
      $region56: #{tpu_custom_call.1} parent=5 // pred_fallthru
        _
      %p361 = scmp.le.s32.totalorder 1, %s24
      %p362 = scmp.lt.s32.totalorder %s24, 3
      %p363 = pnand %p361, %p362
      %p364 = pneg %p363
      // Predicated region
      $region61: #{tpu_custom_call.1} parent=5 // pred_check
        _
      $region62: #{tpu_custom_call.1} parent=5 // pred_check_branch
        %366 = sbr.rel (%p363) target = $region64
      $region63: #{tpu_custom_call.1} parent=5 // pred_region
        %s367 = ssub.s32 %s24, 1
        %s368 = sand.u32 %s37, 1
        %s369 = scalar_lea.sflag [#allocation3], %s368
        %s370 = sand.u32 %s37, 1
        %s371 = smul.addr %s370, 8
        %s372 = scalar_lea.vmem [#allocation2], %s371
        // Predicated region
        $region65: #{tpu_custom_call.1} parent=63 // pred_check
          %p373 = pneg %p50
        $region66: #{tpu_custom_call.1} parent=63 // pred_check_branch
          %375 = sbr.rel (%p373) target = $region68
        $region67: #{tpu_custom_call.1} parent=63 // pred_region
          %376 = dma.done %s369, 128
        $region68: #{tpu_custom_call.1} parent=63 // pred_fallthru
          _
        // Predicated region
        $region69: #{tpu_custom_call.1} parent=63 // pred_check
          %p377 = pneg %p113
        $region70: #{tpu_custom_call.1} parent=63 // pred_check_branch
          %379 = sbr.rel (%p377) target = $region72
        $region71: #{tpu_custom_call.1} parent=63 // pred_region
          %380 = dma.done [#allocation6], 16
        $region72: #{tpu_custom_call.1} parent=63 // pred_fallthru
          _
        %s381 = sand.u32 %s37, 1
        %s382 = scalar_lea.sflag [#allocation3], %s381
        %s383 = sand.u32 %s37, 1
        %s384 = smul.addr %s383, 8
        %s385 = scalar_lea.vmem [#allocation2], %s384
        %p386 = pneg %p50
        %p387 = pneg %p47
        %p388 = pneg %p71
        %p389 = pneg %p68
        %p390 = pneg %p92
        %p391 = pneg %p89
        %p392 = pneg %p113
        %p393 = pneg %p110
        %p394 = pneg %p134
        %p395 = pneg %p131
        %p396 = pneg %p155
        %p397 = pneg %p152
        %p398 = pneg %p176
        %p399 = pneg %p173
        %p400 = pneg %p197
        %p401 = pneg %p194
        %p402 = pneg %p218
        %p403 = pneg %p215
        %p404 = pneg %p239
        %p405 = pneg %p236
        %p406 = pneg %p260
        %p407 = pneg %p257
        %p408 = pneg %p286
        %p409 = pneg %p283
        %s410 = sand.u32 %s273, 1
        %s411 = scalar_lea.sflag [#allocation4], %s410
        %s412 = sand.u32 %s273, 1
        %s413 = smul.addr %s412, 8
        %s414 = scalar_lea.vmem [#allocation7], %s413
        %v415 = vld [vmem:[%s372] sm:$0xff]
        %v416 = vmul.f32 %v415, %v415
        %vm417 = vcmask 261120
        %v418 = vsel %vm417, %v416, 0.0
        %419 = vadd.xlane.f32.xlu0 %v418
        %v420 = vpop.xlane.xlu0 %419
        %v421 = vrcp.pop 32.0
        %v422 = vmul.f32 %v420, %v421
        %v423 = vadd.f32 %v422, 1e-06
        %v424 = vrsqrt.pop %v423
        %v425 = vmul.f32 %v415, %v424
        %v426 = vld [vmem:[%s1] sm:$0x1]
        %v428 = vlaneseq
        %v429 = vshrl.u32 %v428, 7
        %v430 = vsub.s32 0, %v429
        %v431 = vrot.slane %v426, %v430
        %v433 = vmul.f32 %v425, %v431
        %v434 = vld [vmem:[%s4] sm:$0xff]
        %v435 = vld [vmem:[%s4 + $0x8] sm:$0xff]
        %v436 = vld [vmem:[%s4 + $0x10] sm:$0xff]
        %v437 = vld [vmem:[%s4 + $0x18] sm:$0xff]
        %v439 = vsel %vm417, %v433, 0
        %441 = vmatprep.subr.mxu0 0.0
        %442 = vmatpush1.msra.mxu0 %v434
        %443 = vmatprep.subr.mxu0 0.0
        %444 = vmatpush1.msra.mxu0 %v435
        %445 = vmatprep.subr.mxu0 0.0
        %446 = vmatpush1.msra.mxu0 %v436
        %447 = vmatprep.subr.mxu0 0.0
        %448 = vmatpush1.msra.mxu0 %v437
        %449 = vmatprep.subr.mxu0 0.0
        %450 = vmatpush1.msra.mxu0 0.0
        %451 = vmatprep.subr.mxu0 0.0
        %452 = vmatpush1.msra.mxu0 0.0
        %453 = vmatprep.subr.mxu0 0.0
        %454 = vmatpush1.msra.mxu0 0.0
        %455 = vmatprep.subr.mxu0 0.0
        %456 = vmatpush1.msra.mxu0 0.0
        %457 = vmatprep.subr.mxu0 0.0
        %458 = vmatpush1.msra.mxu0 0.0
        %459 = vmatprep.subr.mxu0 0.0
        %460 = vmatpush1.msra.mxu0 0.0
        %461 = vmatprep.subr.mxu0 0.0
        %462 = vmatpush1.msra.mxu0 0.0
        %463 = vmatprep.subr.mxu0 0.0
        %464 = vmatpush1.msra.mxu0 0.0
        %465 = vmatprep.subr.mxu0 0.0
        %466 = vmatpush1.msra.mxu0 0.0
        %467 = vmatprep.subr.mxu0 0.0
        %468 = vmatpush1.msra.mxu0 0.0
        %469 = vmatprep.subr.mxu0 0.0
        %470 = vmatpush1.msra.mxu0 0.0
        %471 = vmatprep.subr.mxu0 0.0
        %472 = vmatpush1.msra.mxu0 0.0
        %473 = vmatprep.subr.mxu0 0.0
        %474 = vmatpush1.msra.mxu0 0.0
        %475 = vmatprep.subr.mxu0 0.0
        %476 = vmatpush1.msra.mxu0 0.0
        %477 = vmatprep.subr.mxu0 0.0
        %478 = vmatpush1.msra.mxu0 0.0
        %479 = vmatprep.subr.mxu0 0.0
        %480 = vmatpush1.msra.mxu0 0.0
        %481 = vmatprep.subr.mxu0 0.0
        %482 = vmatpush1.msra.mxu0 0.0
        %483 = vmatprep.subr.mxu0 0.0
        %484 = vmatpush1.msra.mxu0 0.0
        %485 = vmatprep.subr.mxu0 0.0
        %486 = vmatpush1.msra.mxu0 0.0
        %487 = vmatprep.subr.mxu0 0.0
        %488 = vmatpush1.msra.mxu0 0.0
        %489 = vmatprep.subr.mxu0 0.0
        %490 = vmatpush1.msra.mxu0 0.0
        %491 = vmatprep.subr.mxu0 0.0
        %492 = vmatpush1.msra.mxu0 0.0
        %493 = vmatprep.subr.mxu0 0.0
        %494 = vmatpush1.msra.mxu0 0.0
        %495 = vmatprep.subr.mxu0 0.0
        %496 = vmatpush1.msra.mxu0 0.0
        %497 = vmatprep.subr.mxu0 0.0
        %498 = vmatpush1.msra.mxu0 0.0
        %499 = vmatprep.subr.mxu0 0.0
        %500 = vmatpush1.msra.mxu0 0.0
        %501 = vmatprep.subr.mxu0 0.0
        %502 = vmatpush1.msra.mxu0 0.0
        %503 = vmatprep.subr.mxu0 0.0
        %504 = vmatpush1.msra.mxu0 0.0
        %505 = vmatprep.mubr.f32.mxu0 0.0
        %506 = vmatmul.mubr.f32.gmra.mrb[0].mxu0 %v439
        %v507 = vpop.f32.mrb[0].mxu0
        %v508 = vadd.f32 0.0, %v507
        %v509 = vpop.f32.mrb[0].mxu0
        %510 = vdwg.mxu0
        %v511 = vmul.f32 %v508, %v508
        %vm512 = vcmask 130048
        %v513 = vsel %vm512, %v511, 0.0
        %514 = vadd.xlane.f32.xlu0 %v513
        %v515 = vpop.xlane.xlu0 %514
        %v516 = vrcp.pop 16.0
        %v517 = vmul.f32 %v515, %v516
        %v518 = vadd.f32 %v517, 1e-06
        %v519 = vrsqrt.pop %v518
        %v520 = vmul.f32 %v508, %v519
        %v521 = vld [vmem:[%s2] sm:$0x1]
        %v523 = vlaneseq
        %v524 = vshrl.u32 %v523, 7
        %v525 = vsub.s32 0, %v524
        %v526 = vrot.slane %v521, %v525
        %v528 = vmul.f32 %v520, %v526
        %v529 = vld [vmem:[%s8] sm:$0xff]
        %531 = vrot.lane.b32.xlu0 %v529, 48
        %v532 = vpop.permute.xlu0 %531
        %v534 = vmul.f32 %v508, %v532
        %v535 = vld [vmem:[%s9] sm:$0xff]
        %537 = vrot.lane.b32.xlu0 %v535, 72
        %v538 = vpop.permute.xlu0 %537
        %v540 = vmul.f32 %v508, %v538
        %542 = vrot.lane.b32.xlu0 %v540, 104
        %v543 = vpop.permute.xlu0 %542
        %v545 = vadd.f32 %v534, %v543
        %v546 = vld [vmem:[%s10] sm:$0xff]
        %548 = vrot.lane.b32.xlu0 %v545, 80
        %v549 = vpop.permute.xlu0 %548
        %550 = vrot.lane.b32.xlu0 %v545, 64
        %v551 = vpop.permute.xlu0 %550
        %vm552 = vcmask 64512
        %v553 = vsel %vm552, %v549, 0
        %v555 = vsel %vm552, %v551, 0
        %557 = vmatprep.subr.mxu0 0.0
        %558 = vmatpush1.xpose.msra.mxu0 %v555
        %559 = vmatprep.subr.mxu0 0.0
        %560 = vmatpush1.xpose.msra.mxu0 0.0
        %561 = vmatprep.subr.mxu0 0.0
        %562 = vmatpush1.xpose.msra.mxu0 0.0
        %563 = vmatprep.subr.mxu0 0.0
        %564 = vmatpush1.xpose.msra.mxu0 0.0
        %565 = vmatprep.subr.mxu0 0.0
        %566 = vmatpush1.xpose.msra.mxu0 0.0
        %567 = vmatprep.subr.mxu0 0.0
        %568 = vmatpush1.xpose.msra.mxu0 0.0
        %569 = vmatprep.subr.mxu0 0.0
        %570 = vmatpush1.xpose.msra.mxu0 0.0
        %571 = vmatprep.subr.mxu0 0.0
        %572 = vmatpush1.xpose.msra.mxu0 0.0
        %573 = vmatprep.subr.mxu0 0.0
        %574 = vmatpush1.xpose.msra.mxu0 0.0
        %575 = vmatprep.subr.mxu0 0.0
        %576 = vmatpush1.xpose.msra.mxu0 0.0
        %577 = vmatprep.subr.mxu0 0.0
        %578 = vmatpush1.xpose.msra.mxu0 0.0
        %579 = vmatprep.subr.mxu0 0.0
        %580 = vmatpush1.xpose.msra.mxu0 0.0
        %581 = vmatprep.subr.mxu0 0.0
        %582 = vmatpush1.xpose.msra.mxu0 0.0
        %583 = vmatprep.subr.mxu0 0.0
        %584 = vmatpush1.xpose.msra.mxu0 0.0
        %585 = vmatprep.subr.mxu0 0.0
        %586 = vmatpush1.xpose.msra.mxu0 0.0
        %587 = vmatprep.subr.mxu0 0.0
        %588 = vmatpush1.xpose.msra.mxu0 0.0
        %589 = vmatprep.subr.mxu0 0.0
        %590 = vmatpush1.xpose.msra.mxu0 0.0
        %591 = vmatprep.subr.mxu0 0.0
        %592 = vmatpush1.xpose.msra.mxu0 0.0
        %593 = vmatprep.subr.mxu0 0.0
        %594 = vmatpush1.xpose.msra.mxu0 0.0
        %595 = vmatprep.subr.mxu0 0.0
        %596 = vmatpush1.xpose.msra.mxu0 0.0
        %597 = vmatprep.subr.mxu0 0.0
        %598 = vmatpush1.xpose.msra.mxu0 0.0
        %599 = vmatprep.subr.mxu0 0.0
        %600 = vmatpush1.xpose.msra.mxu0 0.0
        %601 = vmatprep.subr.mxu0 0.0
        %602 = vmatpush1.xpose.msra.mxu0 0.0
        %603 = vmatprep.subr.mxu0 0.0
        %604 = vmatpush1.xpose.msra.mxu0 0.0
        %605 = vmatprep.subr.mxu0 0.0
        %606 = vmatpush1.xpose.msra.mxu0 0.0
        %607 = vmatprep.subr.mxu0 0.0
        %608 = vmatpush1.xpose.msra.mxu0 0.0
        %609 = vmatprep.subr.mxu0 0.0
        %610 = vmatpush1.xpose.msra.mxu0 0.0
        %611 = vmatprep.subr.mxu0 0.0
        %612 = vmatpush1.xpose.msra.mxu0 0.0
        %613 = vmatprep.subr.mxu0 0.0
        %614 = vmatpush1.xpose.msra.mxu0 0.0
        %615 = vmatprep.subr.mxu0 0.0
        %616 = vmatpush1.xpose.msra.mxu0 0.0
        %617 = vmatprep.subr.mxu0 0.0
        %618 = vmatpush1.xpose.msra.mxu0 0.0
        %619 = vmatprep.subr.mxu0 0.0
        %620 = vmatpush1.xpose.msra.mxu0 0.0
        %621 = vmatprep.mubr.f32.mxu0 0.0
        %622 = vmatmul.mubr.f32.gmra.mrb[0].mxu0 %v553
        %v623 = vpop.f32.mrb[0].mxu0
        %v624 = vadd.f32 0.0, %v623
        %v625 = vpop.f32.mrb[0].mxu0
        %626 = vdwg.mxu0
        %628 = vrot.lane.b32.xlu0 %v508, 112
        %v629 = vpop.permute.xlu0 %628
        %v630 = vsel %vm512, %v629, 0
        %v633 = vsel %vm512, %v528, 0
        %635 = vmatprep.subr.mxu0 0.0
        %636 = vmatpush1.xpose.msra.mxu0 %v633
        %637 = vmatprep.subr.mxu0 0.0
        %638 = vmatpush1.xpose.msra.mxu0 0.0
        %639 = vmatprep.subr.mxu0 0.0
        %640 = vmatpush1.xpose.msra.mxu0 0.0
        %641 = vmatprep.subr.mxu0 0.0
        %642 = vmatpush1.xpose.msra.mxu0 0.0
        %643 = vmatprep.subr.mxu0 0.0
        %644 = vmatpush1.xpose.msra.mxu0 0.0
        %645 = vmatprep.subr.mxu0 0.0
        %646 = vmatpush1.xpose.msra.mxu0 0.0
        %647 = vmatprep.subr.mxu0 0.0
        %648 = vmatpush1.xpose.msra.mxu0 0.0
        %649 = vmatprep.subr.mxu0 0.0
        %650 = vmatpush1.xpose.msra.mxu0 0.0
        %651 = vmatprep.subr.mxu0 0.0
        %652 = vmatpush1.xpose.msra.mxu0 0.0
        %653 = vmatprep.subr.mxu0 0.0
        %654 = vmatpush1.xpose.msra.mxu0 0.0
        %655 = vmatprep.subr.mxu0 0.0
        %656 = vmatpush1.xpose.msra.mxu0 0.0
        %657 = vmatprep.subr.mxu0 0.0
        %658 = vmatpush1.xpose.msra.mxu0 0.0
        %659 = vmatprep.subr.mxu0 0.0
        %660 = vmatpush1.xpose.msra.mxu0 0.0
        %661 = vmatprep.subr.mxu0 0.0
        %662 = vmatpush1.xpose.msra.mxu0 0.0
        %663 = vmatprep.subr.mxu0 0.0
        %664 = vmatpush1.xpose.msra.mxu0 0.0
        %665 = vmatprep.subr.mxu0 0.0
        %666 = vmatpush1.xpose.msra.mxu0 0.0
        %667 = vmatprep.subr.mxu0 0.0
        %668 = vmatpush1.xpose.msra.mxu0 0.0
        %669 = vmatprep.subr.mxu0 0.0
        %670 = vmatpush1.xpose.msra.mxu0 0.0
        %671 = vmatprep.subr.mxu0 0.0
        %672 = vmatpush1.xpose.msra.mxu0 0.0
        %673 = vmatprep.subr.mxu0 0.0
        %674 = vmatpush1.xpose.msra.mxu0 0.0
        %675 = vmatprep.subr.mxu0 0.0
        %676 = vmatpush1.xpose.msra.mxu0 0.0
        %677 = vmatprep.subr.mxu0 0.0
        %678 = vmatpush1.xpose.msra.mxu0 0.0
        %679 = vmatprep.subr.mxu0 0.0
        %680 = vmatpush1.xpose.msra.mxu0 0.0
        %681 = vmatprep.subr.mxu0 0.0
        %682 = vmatpush1.xpose.msra.mxu0 0.0
        %683 = vmatprep.subr.mxu0 0.0
        %684 = vmatpush1.xpose.msra.mxu0 0.0
        %685 = vmatprep.subr.mxu0 0.0
        %686 = vmatpush1.xpose.msra.mxu0 0.0
        %687 = vmatprep.subr.mxu0 0.0
        %688 = vmatpush1.xpose.msra.mxu0 0.0
        %689 = vmatprep.subr.mxu0 0.0
        %690 = vmatpush1.xpose.msra.mxu0 0.0
        %691 = vmatprep.subr.mxu0 0.0
        %692 = vmatpush1.xpose.msra.mxu0 0.0
        %693 = vmatprep.subr.mxu0 0.0
        %694 = vmatpush1.xpose.msra.mxu0 0.0
        %695 = vmatprep.subr.mxu0 0.0
        %696 = vmatpush1.xpose.msra.mxu0 0.0
        %697 = vmatprep.subr.mxu0 0.0
        %698 = vmatpush1.xpose.msra.mxu0 0.0
        %699 = vmatprep.mubr.f32.mxu0 0.0
        %700 = vmatmul.mubr.f32.gmra.mrb[0].mxu0 %v630
        %v701 = vpop.f32.mrb[0].mxu0
        %v702 = vadd.f32 %v624, %v701
        %v703 = vpop.f32.mrb[0].mxu0
        %704 = vdwg.mxu0
        %v705 = vmul.f32 %v702, 0.20412415
        %v706 = vadd.f32 %v705, %v546
        %v707 = vsel %vm552, %v706, -inf
        %708 = vmax.xlane.f32.xlu0 %v707
        %v709 = vpop.xlane.xlu0 %708
        %v710 = vsub.f32 %v706, %v709
        %v711 = vmul.f32 %v710, 1.442695
        %v712 = vpow.pop %v711
        %v713 = vsel %vm552, %v712, 0.0
        %714 = vadd.xlane.f32.xlu0 %v713
        %v715 = vpop.xlane.xlu0 %714
        %v716 = vrcp.pop %v715
        %v717 = vmul.f32 %v712, %v716
        %v719 = vsel %vm552, %v717, 0
        %721 = vmatprep.subr.mxu0 0.0
        %722 = vmatpush1.msra.mxu0 %v528
        %723 = vmatprep.subr.mxu0 0.0
        %724 = vmatpush1.msra.mxu0 0.0
        %725 = vmatprep.subr.mxu0 0.0
        %726 = vmatpush1.msra.mxu0 0.0
        %727 = vmatprep.subr.mxu0 0.0
        %728 = vmatpush1.msra.mxu0 0.0
        %729 = vmatprep.subr.mxu0 0.0
        %730 = vmatpush1.msra.mxu0 0.0
        %731 = vmatprep.subr.mxu0 0.0
        %732 = vmatpush1.msra.mxu0 0.0
        %733 = vmatprep.subr.mxu0 0.0
        %734 = vmatpush1.msra.mxu0 0.0
        %735 = vmatprep.subr.mxu0 0.0
        %736 = vmatpush1.msra.mxu0 0.0
        %737 = vmatprep.subr.mxu0 0.0
        %738 = vmatpush1.msra.mxu0 0.0
        %739 = vmatprep.subr.mxu0 0.0
        %740 = vmatpush1.msra.mxu0 0.0
        %741 = vmatprep.subr.mxu0 0.0
        %742 = vmatpush1.msra.mxu0 0.0
        %743 = vmatprep.subr.mxu0 0.0
        %744 = vmatpush1.msra.mxu0 0.0
        %745 = vmatprep.subr.mxu0 0.0
        %746 = vmatpush1.msra.mxu0 0.0
        %747 = vmatprep.subr.mxu0 0.0
        %748 = vmatpush1.msra.mxu0 0.0
        %749 = vmatprep.subr.mxu0 0.0
        %750 = vmatpush1.msra.mxu0 0.0
        %751 = vmatprep.subr.mxu0 0.0
        %752 = vmatpush1.msra.mxu0 0.0
        %753 = vmatprep.subr.mxu0 0.0
        %754 = vmatpush1.msra.mxu0 0.0
        %755 = vmatprep.subr.mxu0 0.0
        %756 = vmatpush1.msra.mxu0 0.0
        %757 = vmatprep.subr.mxu0 0.0
        %758 = vmatpush1.msra.mxu0 0.0
        %759 = vmatprep.subr.mxu0 0.0
        %760 = vmatpush1.msra.mxu0 0.0
        %761 = vmatprep.subr.mxu0 0.0
        %762 = vmatpush1.msra.mxu0 0.0
        %763 = vmatprep.subr.mxu0 0.0
        %764 = vmatpush1.msra.mxu0 0.0
        %765 = vmatprep.subr.mxu0 0.0
        %766 = vmatpush1.msra.mxu0 0.0
        %767 = vmatprep.subr.mxu0 0.0
        %768 = vmatpush1.msra.mxu0 0.0
        %769 = vmatprep.subr.mxu0 0.0
        %770 = vmatpush1.msra.mxu0 0.0
        %771 = vmatprep.subr.mxu0 0.0
        %772 = vmatpush1.msra.mxu0 0.0
        %773 = vmatprep.subr.mxu0 0.0
        %774 = vmatpush1.msra.mxu0 0.0
        %775 = vmatprep.subr.mxu0 0.0
        %776 = vmatpush1.msra.mxu0 0.0
        %777 = vmatprep.subr.mxu0 0.0
        %778 = vmatpush1.msra.mxu0 0.0
        %779 = vmatprep.subr.mxu0 0.0
        %780 = vmatpush1.msra.mxu0 0.0
        %781 = vmatprep.subr.mxu0 0.0
        %782 = vmatpush1.msra.mxu0 0.0
        %783 = vmatprep.subr.mxu0 0.0
        %784 = vmatpush1.msra.mxu0 0.0
        %785 = vmatprep.mubr.f32.mxu0 0.0
        %786 = vmatmul.mubr.f32.gmra.mrb[0].mxu0 %v719
        %v787 = vpop.f32.mrb[0].mxu0
        %v788 = vadd.f32 0.0, %v787
        %v789 = vpop.f32.mrb[0].mxu0
        %790 = vdwg.mxu0
        %791 = vrot.lane.b32.xlu0 %v545, 72
        %v792 = vpop.permute.xlu0 %791
        %v793 = vsel %vm552, %v792, 0
        %795 = vmatprep.subr.mxu0 0.0
        %796 = vmatpush1.xpose.msra.mxu0 %v555
        %797 = vmatprep.subr.mxu0 0.0
        %798 = vmatpush1.xpose.msra.mxu0 0.0
        %799 = vmatprep.subr.mxu0 0.0
        %800 = vmatpush1.xpose.msra.mxu0 0.0
        %801 = vmatprep.subr.mxu0 0.0
        %802 = vmatpush1.xpose.msra.mxu0 0.0
        %803 = vmatprep.subr.mxu0 0.0
        %804 = vmatpush1.xpose.msra.mxu0 0.0
        %805 = vmatprep.subr.mxu0 0.0
        %806 = vmatpush1.xpose.msra.mxu0 0.0
        %807 = vmatprep.subr.mxu0 0.0
        %808 = vmatpush1.xpose.msra.mxu0 0.0
        %809 = vmatprep.subr.mxu0 0.0
        %810 = vmatpush1.xpose.msra.mxu0 0.0
        %811 = vmatprep.subr.mxu0 0.0
        %812 = vmatpush1.xpose.msra.mxu0 0.0
        %813 = vmatprep.subr.mxu0 0.0
        %814 = vmatpush1.xpose.msra.mxu0 0.0
        %815 = vmatprep.subr.mxu0 0.0
        %816 = vmatpush1.xpose.msra.mxu0 0.0
        %817 = vmatprep.subr.mxu0 0.0
        %818 = vmatpush1.xpose.msra.mxu0 0.0
        %819 = vmatprep.subr.mxu0 0.0
        %820 = vmatpush1.xpose.msra.mxu0 0.0
        %821 = vmatprep.subr.mxu0 0.0
        %822 = vmatpush1.xpose.msra.mxu0 0.0
        %823 = vmatprep.subr.mxu0 0.0
        %824 = vmatpush1.xpose.msra.mxu0 0.0
        %825 = vmatprep.subr.mxu0 0.0
        %826 = vmatpush1.xpose.msra.mxu0 0.0
        %827 = vmatprep.subr.mxu0 0.0
        %828 = vmatpush1.xpose.msra.mxu0 0.0
        %829 = vmatprep.subr.mxu0 0.0
        %830 = vmatpush1.xpose.msra.mxu0 0.0
        %831 = vmatprep.subr.mxu0 0.0
        %832 = vmatpush1.xpose.msra.mxu0 0.0
        %833 = vmatprep.subr.mxu0 0.0
        %834 = vmatpush1.xpose.msra.mxu0 0.0
        %835 = vmatprep.subr.mxu0 0.0
        %836 = vmatpush1.xpose.msra.mxu0 0.0
        %837 = vmatprep.subr.mxu0 0.0
        %838 = vmatpush1.xpose.msra.mxu0 0.0
        %839 = vmatprep.subr.mxu0 0.0
        %840 = vmatpush1.xpose.msra.mxu0 0.0
        %841 = vmatprep.subr.mxu0 0.0
        %842 = vmatpush1.xpose.msra.mxu0 0.0
        %843 = vmatprep.subr.mxu0 0.0
        %844 = vmatpush1.xpose.msra.mxu0 0.0
        %845 = vmatprep.subr.mxu0 0.0
        %846 = vmatpush1.xpose.msra.mxu0 0.0
        %847 = vmatprep.subr.mxu0 0.0
        %848 = vmatpush1.xpose.msra.mxu0 0.0
        %849 = vmatprep.subr.mxu0 0.0
        %850 = vmatpush1.xpose.msra.mxu0 0.0
        %851 = vmatprep.subr.mxu0 0.0
        %852 = vmatpush1.xpose.msra.mxu0 0.0
        %853 = vmatprep.subr.mxu0 0.0
        %854 = vmatpush1.xpose.msra.mxu0 0.0
        %855 = vmatprep.subr.mxu0 0.0
        %856 = vmatpush1.xpose.msra.mxu0 0.0
        %857 = vmatprep.subr.mxu0 0.0
        %858 = vmatpush1.xpose.msra.mxu0 0.0
        %859 = vmatprep.mubr.f32.mxu0 0.0
        %860 = vmatmul.mubr.f32.gmra.mrb[0].mxu0 %v793
        %v861 = vpop.f32.mrb[0].mxu0
        %v862 = vadd.f32 0.0, %v861
        %v863 = vpop.f32.mrb[0].mxu0
        %864 = vdwg.mxu0
        %865 = vrot.lane.b32.xlu0 %v508, 96
        %v866 = vpop.permute.xlu0 %865
        %v867 = vsel %vm512, %v866, 0
        %869 = vmatprep.subr.mxu0 0.0
        %870 = vmatpush1.xpose.msra.mxu0 %v633
        %871 = vmatprep.subr.mxu0 0.0
        %872 = vmatpush1.xpose.msra.mxu0 0.0
        %873 = vmatprep.subr.mxu0 0.0
        %874 = vmatpush1.xpose.msra.mxu0 0.0
        %875 = vmatprep.subr.mxu0 0.0
        %876 = vmatpush1.xpose.msra.mxu0 0.0
        %877 = vmatprep.subr.mxu0 0.0
        %878 = vmatpush1.xpose.msra.mxu0 0.0
        %879 = vmatprep.subr.mxu0 0.0
        %880 = vmatpush1.xpose.msra.mxu0 0.0
        %881 = vmatprep.subr.mxu0 0.0
        %882 = vmatpush1.xpose.msra.mxu0 0.0
        %883 = vmatprep.subr.mxu0 0.0
        %884 = vmatpush1.xpose.msra.mxu0 0.0
        %885 = vmatprep.subr.mxu0 0.0
        %886 = vmatpush1.xpose.msra.mxu0 0.0
        %887 = vmatprep.subr.mxu0 0.0
        %888 = vmatpush1.xpose.msra.mxu0 0.0
        %889 = vmatprep.subr.mxu0 0.0
        %890 = vmatpush1.xpose.msra.mxu0 0.0
        %891 = vmatprep.subr.mxu0 0.0
        %892 = vmatpush1.xpose.msra.mxu0 0.0
        %893 = vmatprep.subr.mxu0 0.0
        %894 = vmatpush1.xpose.msra.mxu0 0.0
        %895 = vmatprep.subr.mxu0 0.0
        %896 = vmatpush1.xpose.msra.mxu0 0.0
        %897 = vmatprep.subr.mxu0 0.0
        %898 = vmatpush1.xpose.msra.mxu0 0.0
        %899 = vmatprep.subr.mxu0 0.0
        %900 = vmatpush1.xpose.msra.mxu0 0.0
        %901 = vmatprep.subr.mxu0 0.0
        %902 = vmatpush1.xpose.msra.mxu0 0.0
        %903 = vmatprep.subr.mxu0 0.0
        %904 = vmatpush1.xpose.msra.mxu0 0.0
        %905 = vmatprep.subr.mxu0 0.0
        %906 = vmatpush1.xpose.msra.mxu0 0.0
        %907 = vmatprep.subr.mxu0 0.0
        %908 = vmatpush1.xpose.msra.mxu0 0.0
        %909 = vmatprep.subr.mxu0 0.0
        %910 = vmatpush1.xpose.msra.mxu0 0.0
        %911 = vmatprep.subr.mxu0 0.0
        %912 = vmatpush1.xpose.msra.mxu0 0.0
        %913 = vmatprep.subr.mxu0 0.0
        %914 = vmatpush1.xpose.msra.mxu0 0.0
        %915 = vmatprep.subr.mxu0 0.0
        %916 = vmatpush1.xpose.msra.mxu0 0.0
        %917 = vmatprep.subr.mxu0 0.0
        %918 = vmatpush1.xpose.msra.mxu0 0.0
        %919 = vmatprep.subr.mxu0 0.0
        %920 = vmatpush1.xpose.msra.mxu0 0.0
        %921 = vmatprep.subr.mxu0 0.0
        %922 = vmatpush1.xpose.msra.mxu0 0.0
        %923 = vmatprep.subr.mxu0 0.0
        %924 = vmatpush1.xpose.msra.mxu0 0.0
        %925 = vmatprep.subr.mxu0 0.0
        %926 = vmatpush1.xpose.msra.mxu0 0.0
        %927 = vmatprep.subr.mxu0 0.0
        %928 = vmatpush1.xpose.msra.mxu0 0.0
        %929 = vmatprep.subr.mxu0 0.0
        %930 = vmatpush1.xpose.msra.mxu0 0.0
        %931 = vmatprep.subr.mxu0 0.0
        %932 = vmatpush1.xpose.msra.mxu0 0.0
        %933 = vmatprep.mubr.f32.mxu0 0.0
        %934 = vmatmul.mubr.f32.gmra.mrb[0].mxu0 %v867
        %v935 = vpop.f32.mrb[0].mxu0
        %v936 = vadd.f32 %v862, %v935
        %v937 = vpop.f32.mrb[0].mxu0
        %938 = vdwg.mxu0
        %v939 = vmul.f32 %v936, 0.20412415
        %v940 = vadd.f32 %v939, %v546
        %v941 = vsel %vm552, %v940, -inf
        %942 = vmax.xlane.f32.xlu0 %v941
        %v943 = vpop.xlane.xlu0 %942
        %v944 = vsub.f32 %v940, %v943
        %v945 = vmul.f32 %v944, 1.442695
        %v946 = vpow.pop %v945
        %v947 = vsel %vm552, %v946, 0.0
        %948 = vadd.xlane.f32.xlu0 %v947
        %v949 = vpop.xlane.xlu0 %948
        %v950 = vrcp.pop %v949
        %v951 = vmul.f32 %v946, %v950
        %v953 = vsel %vm552, %v951, 0
        %955 = vmatprep.subr.mxu0 0.0
        %956 = vmatpush1.msra.mxu0 %v528
        %957 = vmatprep.subr.mxu0 0.0
        %958 = vmatpush1.msra.mxu0 0.0
        %959 = vmatprep.subr.mxu0 0.0
        %960 = vmatpush1.msra.mxu0 0.0
        %961 = vmatprep.subr.mxu0 0.0
        %962 = vmatpush1.msra.mxu0 0.0
        %963 = vmatprep.subr.mxu0 0.0
        %964 = vmatpush1.msra.mxu0 0.0
        %965 = vmatprep.subr.mxu0 0.0
        %966 = vmatpush1.msra.mxu0 0.0
        %967 = vmatprep.subr.mxu0 0.0
        %968 = vmatpush1.msra.mxu0 0.0
        %969 = vmatprep.subr.mxu0 0.0
        %970 = vmatpush1.msra.mxu0 0.0
        %971 = vmatprep.subr.mxu0 0.0
        %972 = vmatpush1.msra.mxu0 0.0
        %973 = vmatprep.subr.mxu0 0.0
        %974 = vmatpush1.msra.mxu0 0.0
        %975 = vmatprep.subr.mxu0 0.0
        %976 = vmatpush1.msra.mxu0 0.0
        %977 = vmatprep.subr.mxu0 0.0
        %978 = vmatpush1.msra.mxu0 0.0
        %979 = vmatprep.subr.mxu0 0.0
        %980 = vmatpush1.msra.mxu0 0.0
        %981 = vmatprep.subr.mxu0 0.0
        %982 = vmatpush1.msra.mxu0 0.0
        %983 = vmatprep.subr.mxu0 0.0
        %984 = vmatpush1.msra.mxu0 0.0
        %985 = vmatprep.subr.mxu0 0.0
        %986 = vmatpush1.msra.mxu0 0.0
        %987 = vmatprep.subr.mxu0 0.0
        %988 = vmatpush1.msra.mxu0 0.0
        %989 = vmatprep.subr.mxu0 0.0
        %990 = vmatpush1.msra.mxu0 0.0
        %991 = vmatprep.subr.mxu0 0.0
        %992 = vmatpush1.msra.mxu0 0.0
        %993 = vmatprep.subr.mxu0 0.0
        %994 = vmatpush1.msra.mxu0 0.0
        %995 = vmatprep.subr.mxu0 0.0
        %996 = vmatpush1.msra.mxu0 0.0
        %997 = vmatprep.subr.mxu0 0.0
        %998 = vmatpush1.msra.mxu0 0.0
        %999 = vmatprep.subr.mxu0 0.0
        %1000 = vmatpush1.msra.mxu0 0.0
        %1001 = vmatprep.subr.mxu0 0.0
        %1002 = vmatpush1.msra.mxu0 0.0
        %1003 = vmatprep.subr.mxu0 0.0
        %1004 = vmatpush1.msra.mxu0 0.0
        %1005 = vmatprep.subr.mxu0 0.0
        %1006 = vmatpush1.msra.mxu0 0.0
        %1007 = vmatprep.subr.mxu0 0.0
        %1008 = vmatpush1.msra.mxu0 0.0
        %1009 = vmatprep.subr.mxu0 0.0
        %1010 = vmatpush1.msra.mxu0 0.0
        %1011 = vmatprep.subr.mxu0 0.0
        %1012 = vmatpush1.msra.mxu0 0.0
        %1013 = vmatprep.subr.mxu0 0.0
        %1014 = vmatpush1.msra.mxu0 0.0
        %1015 = vmatprep.subr.mxu0 0.0
        %1016 = vmatpush1.msra.mxu0 0.0
        %1017 = vmatprep.subr.mxu0 0.0
        %1018 = vmatpush1.msra.mxu0 0.0
        %1019 = vmatprep.mubr.f32.mxu0 0.0
        %1020 = vmatmul.mubr.f32.gmra.mrb[0].mxu0 %v953
        %v1021 = vpop.f32.mrb[0].mxu0
        %v1022 = vadd.f32 0.0, %v1021
        %v1023 = vpop.f32.mrb[0].mxu0
        %1024 = vdwg.mxu0
        %1026 = vrot.lane.b32.xlu0 %v1022, 16
        %v1027 = vpop.permute.xlu0 %1026
        %v1029 = vsel %vm512, %v788, %v1027
        %v1030 = vld [vmem:[%s5] sm:$0xff]
        %v1031 = vld [vmem:[%s5 + $0x8] sm:$0xff]
        %v1032 = vld [vmem:[%s5 + $0x10] sm:$0xff]
        %v1033 = vld [vmem:[%s5 + $0x18] sm:$0xff]
        %v1035 = vsel %vm417, %v1029, 0
        %1037 = vmatprep.subr.mxu0 0.0
        %1038 = vmatpush1.msra.mxu0 %v1030
        %1039 = vmatprep.subr.mxu0 0.0
        %1040 = vmatpush1.msra.mxu0 %v1031
        %1041 = vmatprep.subr.mxu0 0.0
        %1042 = vmatpush1.msra.mxu0 %v1032
        %1043 = vmatprep.subr.mxu0 0.0
        %1044 = vmatpush1.msra.mxu0 %v1033
        %1045 = vmatprep.subr.mxu0 0.0
        %1046 = vmatpush1.msra.mxu0 0.0
        %1047 = vmatprep.subr.mxu0 0.0
        %1048 = vmatpush1.msra.mxu0 0.0
        %1049 = vmatprep.subr.mxu0 0.0
        %1050 = vmatpush1.msra.mxu0 0.0
        %1051 = vmatprep.subr.mxu0 0.0
        %1052 = vmatpush1.msra.mxu0 0.0
        %1053 = vmatprep.subr.mxu0 0.0
        %1054 = vmatpush1.msra.mxu0 0.0
        %1055 = vmatprep.subr.mxu0 0.0
        %1056 = vmatpush1.msra.mxu0 0.0
        %1057 = vmatprep.subr.mxu0 0.0
        %1058 = vmatpush1.msra.mxu0 0.0
        %1059 = vmatprep.subr.mxu0 0.0
        %1060 = vmatpush1.msra.mxu0 0.0
        %1061 = vmatprep.subr.mxu0 0.0
        %1062 = vmatpush1.msra.mxu0 0.0
        %1063 = vmatprep.subr.mxu0 0.0
        %1064 = vmatpush1.msra.mxu0 0.0
        %1065 = vmatprep.subr.mxu0 0.0
        %1066 = vmatpush1.msra.mxu0 0.0
        %1067 = vmatprep.subr.mxu0 0.0
        %1068 = vmatpush1.msra.mxu0 0.0
        %1069 = vmatprep.subr.mxu0 0.0
        %1070 = vmatpush1.msra.mxu0 0.0
        %1071 = vmatprep.subr.mxu0 0.0
        %1072 = vmatpush1.msra.mxu0 0.0
        %1073 = vmatprep.subr.mxu0 0.0
        %1074 = vmatpush1.msra.mxu0 0.0
        %1075 = vmatprep.subr.mxu0 0.0
        %1076 = vmatpush1.msra.mxu0 0.0
        %1077 = vmatprep.subr.mxu0 0.0
        %1078 = vmatpush1.msra.mxu0 0.0
        %1079 = vmatprep.subr.mxu0 0.0
        %1080 = vmatpush1.msra.mxu0 0.0
        %1081 = vmatprep.subr.mxu0 0.0
        %1082 = vmatpush1.msra.mxu0 0.0
        %1083 = vmatprep.subr.mxu0 0.0
        %1084 = vmatpush1.msra.mxu0 0.0
        %1085 = vmatprep.subr.mxu0 0.0
        %1086 = vmatpush1.msra.mxu0 0.0
        %1087 = vmatprep.subr.mxu0 0.0
        %1088 = vmatpush1.msra.mxu0 0.0
        %1089 = vmatprep.subr.mxu0 0.0
        %1090 = vmatpush1.msra.mxu0 0.0
        %1091 = vmatprep.subr.mxu0 0.0
        %1092 = vmatpush1.msra.mxu0 0.0
        %1093 = vmatprep.subr.mxu0 0.0
        %1094 = vmatpush1.msra.mxu0 0.0
        %1095 = vmatprep.subr.mxu0 0.0
        %1096 = vmatpush1.msra.mxu0 0.0
        %1097 = vmatprep.subr.mxu0 0.0
        %1098 = vmatpush1.msra.mxu0 0.0
        %1099 = vmatprep.subr.mxu0 0.0
        %1100 = vmatpush1.msra.mxu0 0.0
        %1101 = vmatprep.mubr.f32.mxu0 0.0
        %1102 = vmatmul.mubr.f32.gmra.mrb[0].mxu0 %v1035
        %v1103 = vpop.f32.mrb[0].mxu0
        %v1104 = vadd.f32 0.0, %v1103
        %v1105 = vpop.f32.mrb[0].mxu0
        %1106 = vdwg.mxu0
        %v1107 = vadd.f32 %v415, %v1104
        %v1108 = vmul.f32 %v1107, %v1107
        %v1109 = vsel %vm417, %v1108, 0.0
        %1110 = vadd.xlane.f32.xlu0 %v1109
        %v1111 = vpop.xlane.xlu0 %1110
        %v1112 = vmul.f32 %v1111, %v421
        %v1113 = vadd.f32 %v1112, 1e-06
        %v1114 = vrsqrt.pop %v1113
        %v1115 = vmul.f32 %v1107, %v1114
        %v1116 = vld [vmem:[#allocation5] sm:$0x1]
        %v1118 = vlaneseq
        %v1119 = vshrl.u32 %v1118, 7
        %v1120 = vsub.s32 0, %v1119
        %v1121 = vrot.slane %v1116, %v1120
        %v1123 = vmul.f32 %v1115, %v1121
        %v1124 = vld [vmem:[%s6] sm:$0xff]
        %v1125 = vld [vmem:[%s6 + $0x8] sm:$0xff]
        %v1126 = vld [vmem:[%s6 + $0x10] sm:$0xff]
        %v1127 = vld [vmem:[%s6 + $0x18] sm:$0xff]
        %v1129 = vsel %vm417, %v1123, 0
        %1131 = vmatprep.subr.mxu0 0.0
        %1132 = vmatpush1.msra.mxu0 %v1124
        %1133 = vmatprep.subr.mxu0 0.0
        %1134 = vmatpush1.msra.mxu0 %v1125
        %1135 = vmatprep.subr.mxu0 0.0
        %1136 = vmatpush1.msra.mxu0 %v1126
        %1137 = vmatprep.subr.mxu0 0.0
        %1138 = vmatpush1.msra.mxu0 %v1127
        %1139 = vmatprep.subr.mxu0 0.0
        %1140 = vmatpush1.msra.mxu0 0.0
        %1141 = vmatprep.subr.mxu0 0.0
        %1142 = vmatpush1.msra.mxu0 0.0
        %1143 = vmatprep.subr.mxu0 0.0
        %1144 = vmatpush1.msra.mxu0 0.0
        %1145 = vmatprep.subr.mxu0 0.0
        %1146 = vmatpush1.msra.mxu0 0.0
        %1147 = vmatprep.subr.mxu0 0.0
        %1148 = vmatpush1.msra.mxu0 0.0
        %1149 = vmatprep.subr.mxu0 0.0
        %1150 = vmatpush1.msra.mxu0 0.0
        %1151 = vmatprep.subr.mxu0 0.0
        %1152 = vmatpush1.msra.mxu0 0.0
        %1153 = vmatprep.subr.mxu0 0.0
        %1154 = vmatpush1.msra.mxu0 0.0
        %1155 = vmatprep.subr.mxu0 0.0
        %1156 = vmatpush1.msra.mxu0 0.0
        %1157 = vmatprep.subr.mxu0 0.0
        %1158 = vmatpush1.msra.mxu0 0.0
        %1159 = vmatprep.subr.mxu0 0.0
        %1160 = vmatpush1.msra.mxu0 0.0
        %1161 = vmatprep.subr.mxu0 0.0
        %1162 = vmatpush1.msra.mxu0 0.0
        %1163 = vmatprep.subr.mxu0 0.0
        %1164 = vmatpush1.msra.mxu0 0.0
        %1165 = vmatprep.subr.mxu0 0.0
        %1166 = vmatpush1.msra.mxu0 0.0
        %1167 = vmatprep.subr.mxu0 0.0
        %1168 = vmatpush1.msra.mxu0 0.0
        %1169 = vmatprep.subr.mxu0 0.0
        %1170 = vmatpush1.msra.mxu0 0.0
        %1171 = vmatprep.subr.mxu0 0.0
        %1172 = vmatpush1.msra.mxu0 0.0
        %1173 = vmatprep.subr.mxu0 0.0
        %1174 = vmatpush1.msra.mxu0 0.0
        %1175 = vmatprep.subr.mxu0 0.0
        %1176 = vmatpush1.msra.mxu0 0.0
        %1177 = vmatprep.subr.mxu0 0.0
        %1178 = vmatpush1.msra.mxu0 0.0
        %1179 = vmatprep.subr.mxu0 0.0
        %1180 = vmatpush1.msra.mxu0 0.0
        %1181 = vmatprep.subr.mxu0 0.0
        %1182 = vmatpush1.msra.mxu0 0.0
        %1183 = vmatprep.subr.mxu0 0.0
        %1184 = vmatpush1.msra.mxu0 0.0
        %1185 = vmatprep.subr.mxu0 0.0
        %1186 = vmatpush1.msra.mxu0 0.0
        %1187 = vmatprep.subr.mxu0 0.0
        %1188 = vmatpush1.msra.mxu0 0.0
        %1189 = vmatprep.subr.mxu0 0.0
        %1190 = vmatpush1.msra.mxu0 0.0
        %1191 = vmatprep.subr.mxu0 0.0
        %1192 = vmatpush1.msra.mxu0 0.0
        %1193 = vmatprep.subr.mxu0 0.0
        %1194 = vmatpush1.msra.mxu0 0.0
        %1195 = vmatprep.mubr.f32.mxu0 0.0
        %1196 = vmatmul.mubr.f32.gmra.mrb[0].mxu0 %v1129
        %v1197 = vpop.f32.mrb[0].mxu0
        %v1198 = vadd.f32 0.0, %v1197
        %v1199 = vpop.f32.mrb[0].mxu0
        %1200 = vdwg.mxu0
        %v1201 = vxor.u32 %v1198, 2147483648
        %v1202 = vmul.f32 %v1201, 1.442695
        %v1203 = vpow.pop %v1202
        %v1204 = vadd.f32 %v1203, 1.0
        %v1205 = vrcp.pop %v1204
        %v1206 = vmul.f32 1.0, %v1205
        %v1207 = vmul.f32 %v1198, %v1206
        %1209 = vrot.lane.b32.xlu0 %v1198, 64
        %v1210 = vpop.permute.xlu0 %1209
        %v1212 = vmul.f32 %v1207, %v1210
        %v1213 = vld [vmem:[%s7] sm:$0xff]
        %v1214 = vld [vmem:[%s7 + $0x8] sm:$0xff]
        %v1215 = vld [vmem:[%s7 + $0x10] sm:$0xff]
        %v1216 = vld [vmem:[%s7 + $0x18] sm:$0xff]
        %v1217 = vld [vmem:[%s7 + $0x20] sm:$0xff]
        %v1218 = vld [vmem:[%s7 + $0x28] sm:$0xff]
        %v1219 = vld [vmem:[%s7 + $0x30] sm:$0xff]
        %v1220 = vld [vmem:[%s7 + $0x38] sm:$0xff]
        %vm1221 = vcmask 523264
        %v1223 = vsel %vm1221, %v1212, 0
        %1225 = vmatprep.subr.mxu0 0.0
        %1226 = vmatpush1.msra.mxu0 %v1213
        %1227 = vmatprep.subr.mxu0 0.0
        %1228 = vmatpush1.msra.mxu0 %v1214
        %1229 = vmatprep.subr.mxu0 0.0
        %1230 = vmatpush1.msra.mxu0 %v1215
        %1231 = vmatprep.subr.mxu0 0.0
        %1232 = vmatpush1.msra.mxu0 %v1216
        %1233 = vmatprep.subr.mxu0 0.0
        %1234 = vmatpush1.msra.mxu0 %v1217
        %1235 = vmatprep.subr.mxu0 0.0
        %1236 = vmatpush1.msra.mxu0 %v1218
        %1237 = vmatprep.subr.mxu0 0.0
        %1238 = vmatpush1.msra.mxu0 %v1219
        %1239 = vmatprep.subr.mxu0 0.0
        %1240 = vmatpush1.msra.mxu0 %v1220
        %1241 = vmatprep.subr.mxu0 0.0
        %1242 = vmatpush1.msra.mxu0 0.0
        %1243 = vmatprep.subr.mxu0 0.0
        %1244 = vmatpush1.msra.mxu0 0.0
        %1245 = vmatprep.subr.mxu0 0.0
        %1246 = vmatpush1.msra.mxu0 0.0
        %1247 = vmatprep.subr.mxu0 0.0
        %1248 = vmatpush1.msra.mxu0 0.0
        %1249 = vmatprep.subr.mxu0 0.0
        %1250 = vmatpush1.msra.mxu0 0.0
        %1251 = vmatprep.subr.mxu0 0.0
        %1252 = vmatpush1.msra.mxu0 0.0
        %1253 = vmatprep.subr.mxu0 0.0
        %1254 = vmatpush1.msra.mxu0 0.0
        %1255 = vmatprep.subr.mxu0 0.0
        %1256 = vmatpush1.msra.mxu0 0.0
        %1257 = vmatprep.subr.mxu0 0.0
        %1258 = vmatpush1.msra.mxu0 0.0
        %1259 = vmatprep.subr.mxu0 0.0
        %1260 = vmatpush1.msra.mxu0 0.0
        %1261 = vmatprep.subr.mxu0 0.0
        %1262 = vmatpush1.msra.mxu0 0.0
        %1263 = vmatprep.subr.mxu0 0.0
        %1264 = vmatpush1.msra.mxu0 0.0
        %1265 = vmatprep.subr.mxu0 0.0
        %1266 = vmatpush1.msra.mxu0 0.0
        %1267 = vmatprep.subr.mxu0 0.0
        %1268 = vmatpush1.msra.mxu0 0.0
        %1269 = vmatprep.subr.mxu0 0.0
        %1270 = vmatpush1.msra.mxu0 0.0
        %1271 = vmatprep.subr.mxu0 0.0
        %1272 = vmatpush1.msra.mxu0 0.0
        %1273 = vmatprep.subr.mxu0 0.0
        %1274 = vmatpush1.msra.mxu0 0.0
        %1275 = vmatprep.subr.mxu0 0.0
        %1276 = vmatpush1.msra.mxu0 0.0
        %1277 = vmatprep.subr.mxu0 0.0
        %1278 = vmatpush1.msra.mxu0 0.0
        %1279 = vmatprep.subr.mxu0 0.0
        %1280 = vmatpush1.msra.mxu0 0.0
        %1281 = vmatprep.subr.mxu0 0.0
        %1282 = vmatpush1.msra.mxu0 0.0
        %1283 = vmatprep.subr.mxu0 0.0
        %1284 = vmatpush1.msra.mxu0 0.0
        %1285 = vmatprep.subr.mxu0 0.0
        %1286 = vmatpush1.msra.mxu0 0.0
        %1287 = vmatprep.subr.mxu0 0.0
        %1288 = vmatpush1.msra.mxu0 0.0
        %1289 = vmatprep.mubr.f32.mxu0 0.0
        %1290 = vmatmul.mubr.f32.gmra.mrb[0].mxu0 %v1223
        %v1291 = vpop.f32.mrb[0].mxu0
        %v1292 = vadd.f32 0.0, %v1291
        %v1293 = vpop.f32.mrb[0].mxu0
        %1294 = vdwg.mxu0
        %v1295 = vadd.f32 %v1107, %v1292
        %1296 = vst.msk [vmem:[%s414] sm:$0xff] %vm417, %v1295
        %s1297 = sand.u32 %s273, 1
        %s1298 = scalar_lea.sflag [#allocation4], %s1297
        %s1299 = sand.u32 %s273, 1
        %s1300 = smul.addr %s1299, 8
        %s1301 = scalar_lea.vmem [#allocation7], %s1300
        // Predicated region
        $region73: #{tpu_custom_call.1} parent=63 // pred_check
          %p1302 = pneg %p283
        $region74: #{tpu_custom_call.1} parent=63 // pred_check_branch
          %1304 = sbr.rel (%p1302) target = $region76
        $region75: #{tpu_custom_call.1} parent=63 // pred_region
          %s1306 = ssub.s32 128, 128
          %1307 = vsyncadd %s1298, %s1306
          %s1308 = smul.addr %s29, 128
          %s1309 = scalar_lea.hbm %s11, %s1308
          %s1311 = sshll.u32 %s1301, 4
          %s1312 = int_to_ptr.vmem [resolvable:$true] %s1311
          %1314 = dma.vmem_to_hbm [thread:$0]  %s1312, 128, %s1309, %s1298
        $region76: #{tpu_custom_call.1} parent=63 // pred_fallthru
          _
      $region64: #{tpu_custom_call.1} parent=5 // pred_fallthru
        _
      %p1315 = scmp.le.s32.totalorder 2, %s24
      // Predicated region
      $region77: #{tpu_custom_call.1} parent=5 // pred_check
        %p1316 = pneg %p1315
      $region78: #{tpu_custom_call.1} parent=5 // pred_check_branch
        %1318 = sbr.rel (%p1316) target = $region80
      $region79: #{tpu_custom_call.1} parent=5 // pred_region
        %s1319 = ssub.s32 %s24, 2
        // Predicated region
        $region81: #{tpu_custom_call.1} parent=79 // pred_check
          %p1320 = pneg %p289
        $region82: #{tpu_custom_call.1} parent=79 // pred_check_branch
          %1322 = sbr.rel (%p1320) target = $region84
        $region83: #{tpu_custom_call.1} parent=79 // pred_region
          %s1323 = sand.u32 %s274, 1
          %s1324 = scalar_lea.sflag [#allocation4], %s1323
          %s1325 = sand.u32 %s274, 1
          %s1326 = smul.addr %s1325, 8
          %s1327 = scalar_lea.vmem [#allocation7], %s1326
          %1328 = dma.done %s1324, 128
        $region84: #{tpu_custom_call.1} parent=79 // pred_fallthru
          _
      $region80: #{tpu_custom_call.1} parent=5 // pred_fallthru
        _
    $region6: #{tpu_custom_call.1} parent=1 // loop_footer
      %s28 = sadd.s32 1, %s24
    $region7: #{tpu_custom_call.1} parent=1 // loop_footer_branch
      %23 = sbr.rel target = $region3
    $region8: #{tpu_custom_call.1} parent=1 // loop_exit
      _
    %1329 = vsyncpa [#allocation3], 1
    %s1330 = scalar_lea.sflag [#allocation3], 1
    %1331 = vsyncpa %s1330, 1
    %1332 = vsyncpa [#allocation6], 1
    %1333 = vsyncpa [#allocation4], 1
    %s1334 = scalar_lea.sflag [#allocation4], 1
    %1335 = vsyncpa %s1334, 1

</llo_original>
